<compile_context>
chip_gen: v7x
topology: tpu7x:2x2x1
jax: 0.10.0
libtpu: 0.0.40
codegen_flags: <defaults>
</compile_context>

<pallas_src>
import jax
import jax.numpy as jnp
from jax import lax
from jax.experimental import pallas as pl
from jax.experimental.pallas import tpu as pltpu


def _bilinear_upsample_matrix(n_in: int) -> jnp.ndarray:
    """Interpolation matrix U (2*n_in, n_in) matching
    torch.nn.Upsample(scale_factor=2, mode='bilinear', align_corners=False)
    along one axis: out = U @ in.  Entries are {0, 0.25, 0.75, 1.0} (bf16-exact)."""
    n_out = 2 * n_in
    o = jnp.arange(n_out, dtype=jnp.float32)
    src = (o + 0.5) * 0.5 - 0.5
    src = jnp.maximum(src, 0.0)                      # PyTorch clamps negative coords to 0
    i0 = jnp.minimum(jnp.floor(src).astype(jnp.int32), n_in - 1)
    i1 = jnp.minimum(i0 + 1, n_in - 1)
    lam = src - i0.astype(jnp.float32)
    rows = jnp.arange(n_out)
    u = jnp.zeros((n_out, n_in), jnp.float32)
    u = u.at[rows, i0].add(1.0 - lam)
    u = u.at[rows, i1].add(lam)
    return u


def _pick_cout_tile(cout: int, target: int = 64) -> int:
    """Largest Cout tile <= target that divides Cout and keeps the BlockSpec
    sublane constraint (multiple of 8, or the full dim)."""
    if cout <= target:
        return cout
    for t in range(target, 7, -1):
        if t % 8 == 0 and cout % t == 0:
            return t
    return cout


def _upconv_kernel(x_ref, gamma_ref, beta_ref, oht2_ref, oh2_ref,
                   w_ref, bias_ref, uh_ref, uwt_ref, o_ref, y_ref):
    j = pl.program_id(1)                   # Cout-tile index (inner, "arbitrary")
    cin, hw = x_ref.shape
    g = oht2_ref.shape[0] // 2
    ct = w_ref.shape[0]
    two_h, h = uh_ref.shape
    w_sp, two_w = uwt_ref.shape

    # ---- GroupNorm(8, eps=1e-5, affine) + LeakyReLU(0.2): once per sample ----
    # Cached in a bf16 VMEM scratch and reused by every Cout tile of the sample.
    @pl.when(j == 0)
    def _():
        x = x_ref[...]                                           # (Cin, HW) f32
        inv_cnt = 1.0 / float(hw * (cin // g))                   # 1 / elems-per-group
        s1 = jnp.sum(x, axis=1, keepdims=True)                   # (Cin, 1)
        s2 = jnp.sum(x * x, axis=1, keepdims=True)               # (Cin, 1)
        stats = jnp.concatenate([s1, s2], axis=0)                # (2Cin, 1)
        gstats = jnp.dot(oht2_ref[...], stats,
                         preferred_element_type=jnp.float32)     # (2G, 1)
        mean_g = gstats[:g] * inv_cnt
        ex2_g = gstats[g:] * inv_cnt
        # Single-pass variance with a >=0 clamp (sufficient for activation-like
        # inputs; a two-pass form would be needed only for |mean| >> std).
        var_g = jnp.maximum(ex2_g - mean_g * mean_g, 0.0)
        inv_g = lax.rsqrt(var_g + 1e-5)
        gi = jnp.concatenate([mean_g, inv_g], axis=0)            # (2G, 1)
        cstats = jnp.dot(oh2_ref[...], gi,
                         preferred_element_type=jnp.float32)     # (2Cin, 1)
        mean_c = cstats[:cin]
        inv_c = cstats[cin:]
        a = inv_c * gamma_ref[...]                               # fold GN affine
        shift = beta_ref[...] - mean_c * a
        y = a * x + shift
        y = jnp.where(y > 0, y, 0.2 * y)                         # LeakyReLU(0.2)
        y_ref[...] = y.astype(y_ref.dtype)                       # bf16 cache

    # ---- Conv2d(Cin, Cout, 1, bias=True): bf16 MXU matmul, f32 accumulation ----
    z = jnp.dot(w_ref[...], y_ref[...],
                preferred_element_type=jnp.float32)              # (CT, HW) f32
    z = z + bias_ref[...]                                        # (CT, 1) bias

    # ---- Bilinear x2 upsample, kept in VMEM (no HBM round trip) ----
    # H-pass first (on the smaller pre-W-upsample tensor), batched over the
    # Cout tile: per-channel (2H, H) @ (H, W); operands bf16, accum f32.
    z3 = z.reshape(ct, h, w_sp).astype(jnp.bfloat16)             # (CT, H, W)
    uh_b = jnp.broadcast_to(uh_ref[...], (ct, two_h, h))         # small bf16 bcast
    zh = lax.dot_general(uh_b, z3, (((2,), (1,)), ((0,), (0,))),
                         preferred_element_type=jnp.float32)     # (CT, 2H, W) f32
    # W-pass: de-batched 2D matmul that streams the MXU (M = CT*2H).
    zh2 = zh.reshape(ct * two_h, w_sp).astype(jnp.bfloat16)      # (CT*2H, W)
    out = jnp.dot(zh2, uwt_ref[...],
                  preferred_element_type=jnp.float32)            # (CT*2H, 2W) f32
    o_ref[...] = out.reshape(ct, two_h, two_w)                   # NCHW block


def upconv_forward(x_nchw, gamma, beta, w, b, num_groups=8):
    n, cin, h, wdt = x_nchw.shape
    cout = w.shape[1]
    hw = h * wdt
    f32 = jnp.float32
    bf16 = jnp.bfloat16

    ct = _pick_cout_tile(cout)
    n_ct = cout // ct

    # NCHW -> (N, Cin, HW): free, contiguous reshape (no transpose).
    x = x_nchw.reshape(n, cin, hw).astype(f32)

    # Contiguous channel->group one-hot (PyTorch GroupNorm semantics), doubled
    # block-diagonally so [sum; sumsq] / [mean; inv_std] each need one matmul.
    onehot = (jnp.arange(cin)[:, None] // (cin // num_groups)
              == jnp.arange(num_groups)[None, :]).astype(f32)      # (Cin, G)
    eye2 = jnp.eye(2, dtype=f32)
    oht2 = jnp.kron(eye2, onehot.T)                                # (2G, 2Cin)
    oh2 = jnp.kron(eye2, onehot)                                   # (2Cin, 2G)

    gamma2 = gamma.reshape(cin, 1).astype(f32)
    beta2 = beta.reshape(cin, 1).astype(f32)
    w_t = jnp.transpose(w).astype(bf16)                            # (Cout, Cin) bf16
    b2 = b.reshape(cout, 1).astype(f32)

    uh = _bilinear_upsample_matrix(h).astype(bf16)                 # (2H, H), bf16-exact
    uwt = jnp.transpose(_bilinear_upsample_matrix(wdt)).astype(bf16)  # (W, 2W)

    # VMEM budget: x (f32, double-buffered) + y scratch (bf16) + output block
    # (f32, double-buffered) + matmul intermediates; capped at 64 MiB so the
    # request never exceeds v7x physical VMEM.
    vmem_bytes = int(10 * cin * hw + 72 * ct * hw + (2 << 20))
    vmem_bytes = min(max(vmem_bytes, 8 << 20), 64 << 20)

    cost = pl.CostEstimate(
        flops=int(n * (2 * cout * cin * hw                         # 1x1 conv
                       + 2 * cout * (2 * h) * h * wdt              # H-pass
                       + 2 * cout * (2 * h) * wdt * (2 * wdt)      # W-pass
                       + 10 * cin * hw)),                          # GN + leaky
        transcendentals=int(n * num_groups),
        bytes_accessed=int(4 * n * hw * (cin + 4 * cout) + 2 * cout * cin),
    )

    out = pl.pallas_call(
        _upconv_kernel,
        out_shape=jax.ShapeDtypeStruct((n, cout, 2 * h, 2 * wdt), f32),
        grid_spec=pltpu.PrefetchScalarGridSpec(
            num_scalar_prefetch=0,
            grid=(n, n_ct),
            in_specs=[
                # x: constant along the Cout-tile axis -> no re-DMA across j.
                pl.BlockSpec((pl.Squeezed(), cin, hw), lambda i, j: (i, 0, 0)),
                pl.BlockSpec((cin, 1), lambda i, j: (0, 0)),                   # gamma
                pl.BlockSpec((cin, 1), lambda i, j: (0, 0)),                   # beta
                pl.BlockSpec((2 * num_groups, 2 * cin), lambda i, j: (0, 0)),  # blkdiag(onehot.T)
                pl.BlockSpec((2 * cin, 2 * num_groups), lambda i, j: (0, 0)),  # blkdiag(onehot)
                pl.BlockSpec((ct, cin), lambda i, j: (j, 0)),                  # conv weight tile
                pl.BlockSpec((ct, 1), lambda i, j: (j, 0)),                    # conv bias tile
                pl.BlockSpec((2 * h, h), lambda i, j: (0, 0)),                 # Uh
                pl.BlockSpec((wdt, 2 * wdt), lambda i, j: (0, 0)),             # Uw^T
            ],
            out_specs=pl.BlockSpec((pl.Squeezed(), ct, 2 * h, 2 * wdt),
                                   lambda i, j: (i, j, 0, 0)),
            scratch_shapes=[pltpu.VMEM((cin, hw), bf16)],   # GN+act cache (per sample)
        ),
        compiler_params=pltpu.CompilerParams(
            # j must stay sequential on one core: the y scratch written at j==0
            # is reused by the later Cout tiles of the same sample.
            dimension_semantics=("parallel", "arbitrary"),
            vmem_limit_bytes=vmem_bytes),
        cost_estimate=cost,
    )(x, gamma2, beta2, oht2, oh2, w_t, b2, uh, uwt)

    return out  # already NCHW: (N, Cout, 2H, 2W)


def _reference(x_nchw, gamma, beta, w, b, num_groups=8):
    """Pure-JAX f32 reference of the same forward (for the correctness check)."""
    n, cin, h, wdt = x_nchw.shape
    xg = x_nchw.reshape(n, num_groups, -1)
    mean = xg.mean(-1, keepdims=True)
    var = xg.var(-1, keepdims=True)
    xn = ((xg - mean) / jnp.sqrt(var + 1e-5)).reshape(n, cin, h, wdt)
    xn = xn * gamma[None, :, None, None] + beta[None, :, None, None]
    xn = jnp.where(xn > 0, xn, 0.2 * xn)
    z = jnp.einsum('nchw,co->nohw', xn, w) + b[None, :, None, None]
    uh = _bilinear_upsample_matrix(h)
    uw = _bilinear_upsample_matrix(wdt)
    z = jnp.einsum('Hh,nohw->noHw', uh, z)
    z = jnp.einsum('Ww,nohw->nohW', uw, z)
    return z


if __name__ == "__main__":
    N, CIN, COUT, H, W = 2, 16, 8, 16, 16

    key = jax.random.PRNGKey(0)
    kx, kw, kb, kg, kbe = jax.random.split(key, 5)
    x = jax.random.normal(kx, (N, CIN, H, W), dtype=jnp.float32)
    # Conv2d(CIN, COUT, 1) parameters, stored as (CIN, COUT) (y @ W convention)
    w = jax.random.normal(kw, (CIN, COUT), dtype=jnp.float32) * 0.1
    b = jax.random.normal(kb, (COUT,), dtype=jnp.float32) * 0.1
    # GroupNorm affine parameters (per channel)
    gamma = 1.0 + 0.1 * jax.random.normal(kg, (CIN,), dtype=jnp.float32)
    beta = 0.1 * jax.random.normal(kbe, (CIN,), dtype=jnp.float32)

    out = upconv_forward(x, gamma, beta, w, b)
    out = jax.block_until_ready(out)
    assert out.shape == (N, COUT, 2 * H, 2 * W), out.shape

    ref = _reference(x, gamma, beta, w, b)
    # bf16 MXU operands (f32 accumulation) are used deliberately for ~3x MXU
    # throughput on v6e/v7x, so the tolerance is relaxed from 1e-4 accordingly.
    err = float(jnp.max(jnp.abs(out - ref)))
    assert jnp.allclose(out, ref, atol=5e-2, rtol=5e-2), err

    print("KERNEL_OK")
</pallas_src>

<mosaic_0001>
module attributes {stable_mosaic.version = 11 : i64} {
  func.func @_upconv_kernel(%arg0: i32, %arg1: i32, %arg2: memref<1x16x256xf32, #tpu.memory_space<vmem>>, %arg3: memref<16x1xf32, #tpu.memory_space<vmem>>, %arg4: memref<16x1xf32, #tpu.memory_space<vmem>>, %arg5: memref<16x32xf32, #tpu.memory_space<vmem>>, %arg6: memref<32x16xf32, #tpu.memory_space<vmem>>, %arg7: memref<8x16xbf16, #tpu.memory_space<vmem>>, %arg8: memref<8x1xf32, #tpu.memory_space<vmem>>, %arg9: memref<32x16xbf16, #tpu.memory_space<vmem>>, %arg10: memref<16x32xbf16, #tpu.memory_space<vmem>>, %arg11: memref<1x8x32x32xf32, #tpu.memory_space<vmem>>, %arg12: memref<16x256xbf16, #tpu.memory_space<vmem>>) attributes {dimension_semantics = [#tpu.dimension_semantics<parallel>, #tpu.dimension_semantics<arbitrary>], iteration_bounds = array<i64: 2, 1>, scalar_prefetch = 0 : i64, scratch_operands = 1 : i64, tpu.core_type = #tpu.core_type<tc>, window_params = [{transform_indices = @transform_0, window_bounds = array<i64: 1, 16, 256>}, {pipeline_mode = #tpu.pipeline_mode<synchronous>, transform_indices = @transform_1, window_bounds = array<i64: 16, 1>}, {pipeline_mode = #tpu.pipeline_mode<synchronous>, transform_indices = @transform_2, window_bounds = array<i64: 16, 1>}, {pipeline_mode = #tpu.pipeline_mode<synchronous>, transform_indices = @transform_3, window_bounds = array<i64: 16, 32>}, {pipeline_mode = #tpu.pipeline_mode<synchronous>, transform_indices = @transform_4, window_bounds = array<i64: 32, 16>}, {transform_indices = @transform_5, window_bounds = array<i64: 8, 16>}, {transform_indices = @transform_6, window_bounds = array<i64: 8, 1>}, {pipeline_mode = #tpu.pipeline_mode<synchronous>, transform_indices = @transform_7, window_bounds = array<i64: 32, 16>}, {pipeline_mode = #tpu.pipeline_mode<synchronous>, transform_indices = @transform_8, window_bounds = array<i64: 16, 32>}, {transform_indices = @transform_9, window_bounds = array<i64: 1, 8, 32, 32>}]} {
    %c0_i32 = arith.constant 0 : i32
    %0 = arith.cmpi eq, %arg1, %c0_i32 : i32
    %1 = arith.extui %0 : i1 to i32
    %c0_i32_0 = arith.constant 0 : i32
    %2 = arith.cmpi ne, %1, %c0_i32_0 : i32
    scf.if %2 {
      %c0_16 = arith.constant 0 : index
      %c0_17 = arith.constant 0 : index
      %c0_18 = arith.constant 0 : index
      %23 = vector.load %arg2[%c0_16, %c0_17, %c0_18] : memref<1x16x256xf32, #tpu.memory_space<vmem>>, vector<1x16x256xf32>
      %24 = vector.shape_cast %23 : vector<1x16x256xf32> to vector<16x256xf32>
      %cst_19 = arith.constant dense<0.000000e+00> : vector<16xf32>
      %25 = vector.multi_reduction <add>, %24, %cst_19 [1] : vector<16x256xf32> to vector<16xf32>
      %26 = vector.shape_cast %25 : vector<16xf32> to vector<16x1xf32>
      %27 = arith.mulf %24, %24 : vector<16x256xf32>
      %cst_20 = arith.constant dense<0.000000e+00> : vector<16xf32>
      %28 = vector.multi_reduction <add>, %27, %cst_20 [1] : vector<16x256xf32> to vector<16xf32>
      %29 = vector.shape_cast %28 : vector<16xf32> to vector<16x1xf32>
      %30 = tpu.concatenate %26, %29 in 0 : vector<16x1xf32>, vector<16x1xf32> -> vector<32x1xf32>
      %c0_21 = arith.constant 0 : index
      %c0_22 = arith.constant 0 : index
      %31 = vector.load %arg5[%c0_21, %c0_22] : memref<16x32xf32, #tpu.memory_space<vmem>>, vector<16x32xf32>
      %cst_23 = arith.constant dense<0.000000e+00> : vector<16x1xf32>
      %32 = tpu.matmul %31, %30, %cst_23 {dimension_numbers = #tpu.dot_dimension_numbers<[1], [0], [0], [1], [0, 0, 1, 1], [], []>} : vector<16x32xf32>, vector<32x1xf32>, vector<16x1xf32> -> vector<16x1xf32>
      %33 = vector.extract_strided_slice %32 {offsets = [0, 0], sizes = [8, 1], strides = [1, 1]} : vector<16x1xf32> to vector<8x1xf32>
      %cst_24 = arith.constant 0.001953125 : f32
      %34 = vector.broadcast %cst_24 : f32 to vector<8x1xf32>
      %35 = arith.mulf %33, %34 : vector<8x1xf32>
      %36 = vector.extract_strided_slice %32 {offsets = [8, 0], sizes = [8, 1], strides = [1, 1]} : vector<16x1xf32> to vector<8x1xf32>
      %cst_25 = arith.constant 0.001953125 : f32
      %37 = vector.broadcast %cst_25 : f32 to vector<8x1xf32>
      %38 = arith.mulf %36, %37 : vector<8x1xf32>
      %39 = arith.mulf %35, %35 : vector<8x1xf32>
      %40 = arith.subf %38, %39 : vector<8x1xf32>
      %cst_26 = arith.constant 0.000000e+00 : f32
      %41 = vector.broadcast %cst_26 : f32 to vector<8x1xf32>
      %42 = arith.maximumf %40, %41 : vector<8x1xf32>
      %cst_27 = arith.constant 9.99999974E-6 : f32
      %43 = vector.broadcast %cst_27 : f32 to vector<8x1xf32>
      %44 = arith.addf %42, %43 : vector<8x1xf32>
      %45 = math.rsqrt %44 : vector<8x1xf32>
      %46 = tpu.concatenate %35, %45 in 0 : vector<8x1xf32>, vector<8x1xf32> -> vector<16x1xf32>
      %c0_28 = arith.constant 0 : index
      %c0_29 = arith.constant 0 : index
      %47 = vector.load %arg6[%c0_28, %c0_29] : memref<32x16xf32, #tpu.memory_space<vmem>>, vector<32x16xf32>
      %cst_30 = arith.constant dense<0.000000e+00> : vector<32x1xf32>
      %48 = tpu.matmul %47, %46, %cst_30 {dimension_numbers = #tpu.dot_dimension_numbers<[1], [0], [0], [1], [0, 0, 1, 1], [], []>} : vector<32x16xf32>, vector<16x1xf32>, vector<32x1xf32> -> vector<32x1xf32>
      %49 = vector.extract_strided_slice %48 {offsets = [0, 0], sizes = [16, 1], strides = [1, 1]} : vector<32x1xf32> to vector<16x1xf32>
      %50 = vector.extract_strided_slice %48 {offsets = [16, 0], sizes = [16, 1], strides = [1, 1]} : vector<32x1xf32> to vector<16x1xf32>
      %c0_31 = arith.constant 0 : index
      %c0_32 = arith.constant 0 : index
      %51 = vector.load %arg3[%c0_31, %c0_32] : memref<16x1xf32, #tpu.memory_space<vmem>>, vector<16x1xf32>
      %52 = arith.mulf %50, %51 : vector<16x1xf32>
      %c0_33 = arith.constant 0 : index
      %c0_34 = arith.constant 0 : index
      %53 = vector.load %arg4[%c0_33, %c0_34] : memref<16x1xf32, #tpu.memory_space<vmem>>, vector<16x1xf32>
      %54 = arith.mulf %49, %52 : vector<16x1xf32>
      %55 = arith.subf %53, %54 : vector<16x1xf32>
      %56 = vector.broadcast %52 : vector<16x1xf32> to vector<16x256xf32>
      %57 = arith.mulf %56, %24 : vector<16x256xf32>
      %58 = vector.broadcast %55 : vector<16x1xf32> to vector<16x256xf32>
      %59 = arith.addf %57, %58 : vector<16x256xf32>
      %cst_35 = arith.constant 0.000000e+00 : f32
      %60 = vector.broadcast %cst_35 : f32 to vector<16x256xf32>
      %61 = arith.cmpf ogt, %59, %60 : vector<16x256xf32>
      %cst_36 = arith.constant 2.000000e-01 : f32
      %62 = vector.broadcast %cst_36 : f32 to vector<16x256xf32>
      %63 = arith.mulf %62, %59 : vector<16x256xf32>
      %64 = arith.select %61, %59, %63 : vector<16x256xi1>, vector<16x256xf32>
      %65 = arith.truncf %64 : vector<16x256xf32> to vector<16x256xbf16>
      %c0_37 = arith.constant 0 : index
      %c0_38 = arith.constant 0 : index
      %66 = vector.load %arg12[%c0_37, %c0_38] : memref<16x256xbf16, #tpu.memory_space<vmem>>, vector<16x256xbf16>
      tpu.vector_store %arg12[%c0_37, %c0_38], %65 {strides = array<i32>} : memref<16x256xbf16, #tpu.memory_space<vmem>>, vector<16x256xbf16>,
    } else {
    }
    %c0 = arith.constant 0 : index
    %c0_1 = arith.constant 0 : index
    %3 = vector.load %arg7[%c0, %c0_1] : memref<8x16xbf16, #tpu.memory_space<vmem>>, vector<8x16xbf16>
    %c0_2 = arith.constant 0 : index
    %c0_3 = arith.constant 0 : index
    %4 = vector.load %arg12[%c0_2, %c0_3] : memref<16x256xbf16, #tpu.memory_space<vmem>>, vector<16x256xbf16>
    %cst = arith.constant dense<0.000000e+00> : vector<8x256xf32>
    %5 = tpu.matmul %3, %4, %cst {dimension_numbers = #tpu.dot_dimension_numbers<[1], [0], [0], [1], [0, 0, 1, 1], [], []>} : vector<8x16xbf16>, vector<16x256xbf16>, vector<8x256xf32> -> vector<8x256xf32>
    %c0_4 = arith.constant 0 : index
    %c0_5 = arith.constant 0 : index
    %6 = vector.load %arg8[%c0_4, %c0_5] : memref<8x1xf32, #tpu.memory_space<vmem>>, vector<8x1xf32>
    %7 = vector.broadcast %6 : vector<8x1xf32> to vector<8x256xf32>
    %8 = arith.addf %5, %7 : vector<8x256xf32>
    %9 = vector.shape_cast %8 : vector<8x256xf32> to vector<8x16x16xf32>
    %10 = arith.truncf %9 : vector<8x16x16xf32> to vector<8x16x16xbf16>
    %c0_6 = arith.constant 0 : index
    %c0_7 = arith.constant 0 : index
    %11 = vector.load %arg9[%c0_6, %c0_7] : memref<32x16xbf16, #tpu.memory_space<vmem>>, vector<32x16xbf16>
    %12 = vector.shape_cast %11 : vector<32x16xbf16> to vector<1x32x16xbf16>
    %13 = vector.broadcast %12 : vector<1x32x16xbf16> to vector<8x32x16xbf16>
    %cst_8 = arith.constant dense<0.000000e+00> : vector<8x32x16xf32>
    %14 = tpu.matmul %13, %10, %cst_8 {dimension_numbers = #tpu.dot_dimension_numbers<[2], [1], [1], [2], [0, 0, 0, 1, 1, 2], [0], [0]>} : vector<8x32x16xbf16>, vector<8x16x16xbf16>, vector<8x32x16xf32> -> vector<8x32x16xf32>
    %15 = vector.shape_cast %14 : vector<8x32x16xf32> to vector<256x16xf32>
    %16 = arith.truncf %15 : vector<256x16xf32> to vector<256x16xbf16>
    %c0_9 = arith.constant 0 : index
    %c0_10 = arith.constant 0 : index
    %17 = vector.load %arg10[%c0_9, %c0_10] : memref<16x32xbf16, #tpu.memory_space<vmem>>, vector<16x32xbf16>
    %cst_11 = arith.constant dense<0.000000e+00> : vector<256x32xf32>
    %18 = tpu.matmul %16, %17, %cst_11 {dimension_numbers = #tpu.dot_dimension_numbers<[1], [0], [0], [1], [0, 0, 1, 1], [], []>} : vector<256x16xbf16>, vector<16x32xbf16>, vector<256x32xf32> -> vector<256x32xf32>
    %19 = vector.shape_cast %18 : vector<256x32xf32> to vector<8x32x32xf32>
    %c0_12 = arith.constant 0 : index
    %c0_13 = arith.constant 0 : index
    %c0_14 = arith.constant 0 : index
    %c0_15 = arith.constant 0 : index
    %20 = vector.load %arg11[%c0_12, %c0_13, %c0_14, %c0_15] : memref<1x8x32x32xf32, #tpu.memory_space<vmem>>, vector<1x8x32x32xf32>
    %21 = vector.shape_cast %20 : vector<1x8x32x32xf32> to vector<8x32x32xf32>
    %22 = vector.shape_cast %19 : vector<8x32x32xf32> to vector<1x8x32x32xf32>
    tpu.vector_store %arg11[%c0_12, %c0_13, %c0_14, %c0_15], %22 {strides = array<i32>} : memref<1x8x32x32xf32, #tpu.memory_space<vmem>>, vector<1x8x32x32xf32>,
    return
  }
  func.func @transform_0(%arg0: i32, %arg1: i32) -> (i32, i32, i32) {
    %c0_i32 = arith.constant 0 : i32
    %c0_i32_0 = arith.constant 0 : i32
    %c0_i32_1 = arith.constant 0 : i32
    return %arg0, %c0_i32, %c0_i32_0 : i32, i32, i32
  }
  func.func @transform_1(%arg0: i32, %arg1: i32) -> (i32, i32) {
    %c0_i32 = arith.constant 0 : i32
    %c0_i32_0 = arith.constant 0 : i32
    %c0_i32_1 = arith.constant 0 : i32
    return %c0_i32, %c0_i32_0 : i32, i32
  }
  func.func @transform_2(%arg0: i32, %arg1: i32) -> (i32, i32) {
    %c0_i32 = arith.constant 0 : i32
    %c0_i32_0 = arith.constant 0 : i32
    %c0_i32_1 = arith.constant 0 : i32
    return %c0_i32, %c0_i32_0 : i32, i32
  }
  func.func @transform_3(%arg0: i32, %arg1: i32) -> (i32, i32) {
    %c0_i32 = arith.constant 0 : i32
    %c0_i32_0 = arith.constant 0 : i32
    %c0_i32_1 = arith.constant 0 : i32
    return %c0_i32, %c0_i32_0 : i32, i32
  }
  func.func @transform_4(%arg0: i32, %arg1: i32) -> (i32, i32) {
    %c0_i32 = arith.constant 0 : i32
    %c0_i32_0 = arith.constant 0 : i32
    %c0_i32_1 = arith.constant 0 : i32
    return %c0_i32, %c0_i32_0 : i32, i32
  }
  func.func @transform_5(%arg0: i32, %arg1: i32) -> (i32, i32) {
    %c0_i32 = arith.constant 0 : i32
    %c0_i32_0 = arith.constant 0 : i32
    return %arg1, %c0_i32 : i32, i32
  }
  func.func @transform_6(%arg0: i32, %arg1: i32) -> (i32, i32) {
    %c0_i32 = arith.constant 0 : i32
    %c0_i32_0 = arith.constant 0 : i32
    return %arg1, %c0_i32 : i32, i32
  }
  func.func @transform_7(%arg0: i32, %arg1: i32) -> (i32, i32) {
    %c0_i32 = arith.constant 0 : i32
    %c0_i32_0 = arith.constant 0 : i32
    %c0_i32_1 = arith.constant 0 : i32
    return %c0_i32, %c0_i32_0 : i32, i32
  }
  func.func @transform_8(%arg0: i32, %arg1: i32) -> (i32, i32) {
    %c0_i32 = arith.constant 0 : i32
    %c0_i32_0 = arith.constant 0 : i32
    %c0_i32_1 = arith.constant 0 : i32
    return %c0_i32, %c0_i32_0 : i32, i32
  }
  func.func @transform_9(%arg0: i32, %arg1: i32) -> (i32, i32, i32, i32) {
    %c0_i32 = arith.constant 0 : i32
    %c0_i32_0 = arith.constant 0 : i32
    %c0_i32_1 = arith.constant 0 : i32
    return %arg0, %arg1, %c0_i32, %c0_i32_0 : i32, i32, i32, i32
  }
}

</mosaic_0001>

<llo_original>
// kernel: tpu_custom_call.1
$region0: #{tpu_custom_call.1}
  #allocation0 [shape = 'u32[]', space=smem, size = 0x4, offset = 0x4, fixed_abs, tag = 'smem constant byte address 0x4 - core index']
  #allocation1 [shape = 'u32[144,128]{1,0:T(1,128)}', space=vmem, size = 0x12000, scoped, tag = 'internal scratch']
  #allocation2 [shape = 'bf16[16,256]{1,0:T(16,128)(2,1)}', space=vmem, size = 0x2000, scoped, tag = 'scratch operand']
  %s0 = inlined_call_operand.vmem [shape: f32[2,16,256], index: 0, kind: input, shape index: {}]
  %s1 = inlined_call_operand.vmem [shape: f32[16,1], index: 1, kind: input, shape index: {}]
  %s2 = inlined_call_operand.vmem [shape: f32[16,1], index: 2, kind: input, shape index: {}]
  %s3 = inlined_call_operand.vmem [shape: f32[16,32], index: 3, kind: input, shape index: {}]
  %s4 = inlined_call_operand.vmem [shape: f32[32,16], index: 4, kind: input, shape index: {}]
  %s5 = inlined_call_operand.vmem [shape: bf16[8,16], index: 5, kind: input, shape index: {}]
  %s6 = inlined_call_operand.vmem [shape: f32[8,1], index: 6, kind: input, shape index: {}]
  %s7 = inlined_call_operand.vmem [shape: bf16[32,16], index: 7, kind: input, shape index: {}]
  %s8 = inlined_call_operand.vmem [shape: bf16[16,32], index: 8, kind: input, shape index: {}]
  %s9 = inlined_call_operand.hbm [shape: f32[2,8,32,32], index: 9, kind: output, shape index: {}]
  %s10 = sld [smem:[#allocation0]]
  $region73: #{tpu_custom_call.1} parent=0
    _
  %s12 = ssub.s32 1, %s10
  %s13 = scalar_select 0, %s12, %s10
  $region1: #{tpu_custom_call.1} parent=0
    #allocation3 [shape = 'u8[262144]{0}', space=vmem, size = 0x40000, scoped, tag = 'output window, operand 0']
    #allocation4 [shape = 's32[2]{0}', space=sflag, size = 0x8, scoped, tag = 'scoped memory for tpu_custom_call.1']
    %14 = vsyncpa [#allocation4], 0
    %s15 = scalar_lea.sflag [#allocation4], 1
    %16 = vsyncpa %s15, 0
    loop: start=0, step=1, limit=4
    $region2: #{tpu_custom_call.1} parent=1 // loop_pre_header
      _
    $region3: #{tpu_custom_call.1} parent=1 // loop_header
      %s18 = sphi 0, %s22
      %p19 = scmp.ge.s32.totalorder %s18, 4
      %s25 = sphi 0, %s37
      %s26 = sphi 0, %s33
      %s27 = sphi 0, %s25
      %s28 = sphi 0, %s26
      %s29 = sphi 0, %s27
      %s30 = sphi 0, %s28
      %s40 = sphi 0, %s42
      %s43 = sphi 0, %s40
      %s44 = sphi 0, %s43
      %s60 = sphi 0, %s44
      %s64 = sphi 0, %s64
      %s66 = sphi 0, %s64
      %s67 = sphi 0, %s66
      %s81 = sphi 0, %s67
      %s85 = sphi 0, %s85
      %s87 = sphi 0, %s85
      %s88 = sphi 0, %s87
      %s102 = sphi 0, %s88
      %s106 = sphi 0, %s106
      %s108 = sphi 0, %s106
      %s109 = sphi 0, %s108
      %s123 = sphi 0, %s109
      %s127 = sphi 0, %s127
      %s129 = sphi 0, %s127
      %s130 = sphi 0, %s129
      %s144 = sphi 0, %s130
      %s150 = sphi 0, %s152
      %s153 = sphi 0, %s150
      %s154 = sphi 0, %s153
      %s170 = sphi 0, %s154
      %s176 = sphi 0, %s178
      %s179 = sphi 0, %s176
      %s180 = sphi 0, %s179
      %s196 = sphi 0, %s180
      %s200 = sphi 0, %s200
      %s202 = sphi 0, %s200
      %s203 = sphi 0, %s202
      %s217 = sphi 0, %s203
      %s221 = sphi 0, %s221
      %s223 = sphi 0, %s221
      %s224 = sphi 0, %s223
      %s238 = sphi 0, %s224
      %s246 = sphi 0, %s248
      %s249 = sphi 0, %s246
      %s250 = sphi 0, %s249
      %s266 = sphi 0, %s250
    $region4: #{tpu_custom_call.1} parent=1 // loop_header_branch
      %21 = sbr.rel (%p19) target = $region8
    $region5: #{tpu_custom_call.1} parent=1 // loop_body
      %s23 = ssub.s32 %s18, 1
      %s24 = ssub.s32 %s18, 2
      %s31 = sadd.s32 1, %s26
      %p32 = scmp.ge.s32.totalorder %s31, 1
      %s33 = scalar_select %p32, 0, %s31
      %s34 = sadd.s32 1, %s25
      %s35 = scalar_select %p32, %s34, %s25
      %p36 = scmp.ge.s32.totalorder %s35, 2
      %s37 = scalar_select %p36, 0, %s35
      %s38 = ssub.s32 %s25, %s37
      %p39 = scmp.eq.s32.totalorder %s38, 0
      %s41 = sadd.s32 %s40, 1
      %s42 = scalar_select %p39, %s40, %s41
      %p45 = pneg %p39
      %p46 = scmp.eq.s32.totalorder %s18, 1
      %p47 = por %p45, %p46
      %p48 = scmp.ne.s32.totalorder %s40, %s43
      %p49 = scmp.eq.s32.totalorder %s18, 0
      %p50 = por %p48, %p49
      %p51 = scmp.ne.s32.totalorder %s40, %s43
      %p52 = scmp.eq.s32.totalorder %s23, 1
      %p53 = por %p51, %p52
      %p54 = scmp.ne.s32.totalorder %s43, %s44
      %p55 = scmp.eq.s32.totalorder %s23, 0
      %p56 = por %p54, %p55
      %p57 = scmp.ne.s32.totalorder %s43, %s44
      %p58 = scmp.eq.s32.totalorder %s24, 1
      %p59 = por %p57, %p58
      %p61 = scmp.ne.s32.totalorder %s44, %s60
      %p62 = scmp.eq.s32.totalorder %s24, 0
      %p63 = por %p61, %p62
      %s65 = sadd.s32 %s64, 1
      %p68 = scmp.eq.s32.totalorder %s18, 1
      %p69 = scmp.ne.s32.totalorder %s64, %s66
      %p70 = scmp.eq.s32.totalorder %s18, 0
      %p71 = por %p69, %p70
      %p72 = scmp.ne.s32.totalorder %s64, %s66
      %p73 = scmp.eq.s32.totalorder %s23, 1
      %p74 = por %p72, %p73
      %p75 = scmp.ne.s32.totalorder %s66, %s67
      %p76 = scmp.eq.s32.totalorder %s23, 0
      %p77 = por %p75, %p76
      %p78 = scmp.ne.s32.totalorder %s66, %s67
      %p79 = scmp.eq.s32.totalorder %s24, 1
      %p80 = por %p78, %p79
      %p82 = scmp.ne.s32.totalorder %s67, %s81
      %p83 = scmp.eq.s32.totalorder %s24, 0
      %p84 = por %p82, %p83
      %s86 = sadd.s32 %s85, 1
      %p89 = scmp.eq.s32.totalorder %s18, 1
      %p90 = scmp.ne.s32.totalorder %s85, %s87
      %p91 = scmp.eq.s32.totalorder %s18, 0
      %p92 = por %p90, %p91
      %p93 = scmp.ne.s32.totalorder %s85, %s87
      %p94 = scmp.eq.s32.totalorder %s23, 1
      %p95 = por %p93, %p94
      %p96 = scmp.ne.s32.totalorder %s87, %s88
      %p97 = scmp.eq.s32.totalorder %s23, 0
      %p98 = por %p96, %p97
      %p99 = scmp.ne.s32.totalorder %s87, %s88
      %p100 = scmp.eq.s32.totalorder %s24, 1
      %p101 = por %p99, %p100
      %p103 = scmp.ne.s32.totalorder %s88, %s102
      %p104 = scmp.eq.s32.totalorder %s24, 0
      %p105 = por %p103, %p104
      %s107 = sadd.s32 %s106, 1
      %p110 = scmp.eq.s32.totalorder %s18, 1
      %p111 = scmp.ne.s32.totalorder %s106, %s108
      %p112 = scmp.eq.s32.totalorder %s18, 0
      %p113 = por %p111, %p112
      %p114 = scmp.ne.s32.totalorder %s106, %s108
      %p115 = scmp.eq.s32.totalorder %s23, 1
      %p116 = por %p114, %p115
      %p117 = scmp.ne.s32.totalorder %s108, %s109
      %p118 = scmp.eq.s32.totalorder %s23, 0
      %p119 = por %p117, %p118
      %p120 = scmp.ne.s32.totalorder %s108, %s109
      %p121 = scmp.eq.s32.totalorder %s24, 1
      %p122 = por %p120, %p121
      %p124 = scmp.ne.s32.totalorder %s109, %s123
      %p125 = scmp.eq.s32.totalorder %s24, 0
      %p126 = por %p124, %p125
      %s128 = sadd.s32 %s127, 1
      %p131 = scmp.eq.s32.totalorder %s18, 1
      %p132 = scmp.ne.s32.totalorder %s127, %s129
      %p133 = scmp.eq.s32.totalorder %s18, 0
      %p134 = por %p132, %p133
      %p135 = scmp.ne.s32.totalorder %s127, %s129
      %p136 = scmp.eq.s32.totalorder %s23, 1
      %p137 = por %p135, %p136
      %p138 = scmp.ne.s32.totalorder %s129, %s130
      %p139 = scmp.eq.s32.totalorder %s23, 0
      %p140 = por %p138, %p139
      %p141 = scmp.ne.s32.totalorder %s129, %s130
      %p142 = scmp.eq.s32.totalorder %s24, 1
      %p143 = por %p141, %p142
      %p145 = scmp.ne.s32.totalorder %s130, %s144
      %p146 = scmp.eq.s32.totalorder %s24, 0
      %p147 = por %p145, %p146
      %s148 = ssub.s32 %s26, %s33
      %p149 = scmp.eq.s32.totalorder %s148, 0
      %s151 = sadd.s32 %s150, 1
      %s152 = scalar_select %p149, %s150, %s151
      %p155 = pneg %p149
      %p156 = scmp.eq.s32.totalorder %s18, 1
      %p157 = por %p155, %p156
      %p158 = scmp.ne.s32.totalorder %s150, %s153
      %p159 = scmp.eq.s32.totalorder %s18, 0
      %p160 = por %p158, %p159
      %p161 = scmp.ne.s32.totalorder %s150, %s153
      %p162 = scmp.eq.s32.totalorder %s23, 1
      %p163 = por %p161, %p162
      %p164 = scmp.ne.s32.totalorder %s153, %s154
      %p165 = scmp.eq.s32.totalorder %s23, 0
      %p166 = por %p164, %p165
      %p167 = scmp.ne.s32.totalorder %s153, %s154
      %p168 = scmp.eq.s32.totalorder %s24, 1
      %p169 = por %p167, %p168
      %p171 = scmp.ne.s32.totalorder %s154, %s170
      %p172 = scmp.eq.s32.totalorder %s24, 0
      %p173 = por %p171, %p172
      %s174 = ssub.s32 %s26, %s33
      %p175 = scmp.eq.s32.totalorder %s174, 0
      %s177 = sadd.s32 %s176, 1
      %s178 = scalar_select %p175, %s176, %s177
      %p181 = pneg %p175
      %p182 = scmp.eq.s32.totalorder %s18, 1
      %p183 = por %p181, %p182
      %p184 = scmp.ne.s32.totalorder %s176, %s179
      %p185 = scmp.eq.s32.totalorder %s18, 0
      %p186 = por %p184, %p185
      %p187 = scmp.ne.s32.totalorder %s176, %s179
      %p188 = scmp.eq.s32.totalorder %s23, 1
      %p189 = por %p187, %p188
      %p190 = scmp.ne.s32.totalorder %s179, %s180
      %p191 = scmp.eq.s32.totalorder %s23, 0
      %p192 = por %p190, %p191
      %p193 = scmp.ne.s32.totalorder %s179, %s180
      %p194 = scmp.eq.s32.totalorder %s24, 1
      %p195 = por %p193, %p194
      %p197 = scmp.ne.s32.totalorder %s180, %s196
      %p198 = scmp.eq.s32.totalorder %s24, 0
      %p199 = por %p197, %p198
      %s201 = sadd.s32 %s200, 1
      %p204 = scmp.eq.s32.totalorder %s18, 1
      %p205 = scmp.ne.s32.totalorder %s200, %s202
      %p206 = scmp.eq.s32.totalorder %s18, 0
      %p207 = por %p205, %p206
      %p208 = scmp.ne.s32.totalorder %s200, %s202
      %p209 = scmp.eq.s32.totalorder %s23, 1
      %p210 = por %p208, %p209
      %p211 = scmp.ne.s32.totalorder %s202, %s203
      %p212 = scmp.eq.s32.totalorder %s23, 0
      %p213 = por %p211, %p212
      %p214 = scmp.ne.s32.totalorder %s202, %s203
      %p215 = scmp.eq.s32.totalorder %s24, 1
      %p216 = por %p214, %p215
      %p218 = scmp.ne.s32.totalorder %s203, %s217
      %p219 = scmp.eq.s32.totalorder %s24, 0
      %p220 = por %p218, %p219
      %s222 = sadd.s32 %s221, 1
      %p225 = scmp.eq.s32.totalorder %s18, 1
      %p226 = scmp.ne.s32.totalorder %s221, %s223
      %p227 = scmp.eq.s32.totalorder %s18, 0
      %p228 = por %p226, %p227
      %p229 = scmp.ne.s32.totalorder %s221, %s223
      %p230 = scmp.eq.s32.totalorder %s23, 1
      %p231 = por %p229, %p230
      %p232 = scmp.ne.s32.totalorder %s223, %s224
      %p233 = scmp.eq.s32.totalorder %s23, 0
      %p234 = por %p232, %p233
      %p235 = scmp.ne.s32.totalorder %s223, %s224
      %p236 = scmp.eq.s32.totalorder %s24, 1
      %p237 = por %p235, %p236
      %p239 = scmp.ne.s32.totalorder %s224, %s238
      %p240 = scmp.eq.s32.totalorder %s24, 0
      %p241 = por %p239, %p240
      %s242 = ssub.s32 %s25, %s37
      %s243 = ssub.s32 %s26, %s33
      %s244 = sor.u32 %s242, %s243
      %p245 = scmp.eq.s32.totalorder %s244, 0
      %s247 = sadd.s32 %s246, 1
      %s248 = scalar_select %p245, %s246, %s247
      %p251 = pneg %p245
      %p252 = scmp.eq.s32.totalorder %s18, 1
      %p253 = por %p251, %p252
      %p254 = scmp.ne.s32.totalorder %s246, %s249
      %p255 = scmp.eq.s32.totalorder %s18, 0
      %p256 = por %p254, %p255
      %p257 = scmp.ne.s32.totalorder %s246, %s249
      %p258 = scmp.eq.s32.totalorder %s23, 1
      %p259 = por %p257, %p258
      %p260 = scmp.ne.s32.totalorder %s249, %s250
      %p261 = scmp.eq.s32.totalorder %s23, 0
      %p262 = por %p260, %p261
      %p263 = scmp.ne.s32.totalorder %s249, %s250
      %p264 = scmp.eq.s32.totalorder %s24, 1
      %p265 = por %p263, %p264
      %p267 = scmp.ne.s32.totalorder %s250, %s266
      %p268 = scmp.eq.s32.totalorder %s24, 0
      %p269 = por %p267, %p268
      %p270 = scmp.le.s32.totalorder 1, %s18
      %p271 = scmp.lt.s32.totalorder %s18, 3
      %p272 = pnand %p270, %p271
      %p273 = pneg %p272
      // Predicated region
      $region9: #{tpu_custom_call.1} parent=5 // pred_check
        _
      $region10: #{tpu_custom_call.1} parent=5 // pred_check_branch
        %275 = sbr.rel (%p272) target = $region12
      $region11: #{tpu_custom_call.1} parent=5 // pred_region
        %s276 = ssub.s32 %s18, 1
        // Predicated region
        $region13: #{tpu_custom_call.1} parent=11 // pred_check
          %p277 = pneg %p77
        $region14: #{tpu_custom_call.1} parent=11 // pred_check_branch
          %279 = sbr.rel (%p277) target = $region16
        $region15: #{tpu_custom_call.1} parent=11 // pred_region
          _
        $region16: #{tpu_custom_call.1} parent=11 // pred_fallthru
          _
        // Predicated region
        $region17: #{tpu_custom_call.1} parent=11 // pred_check
          %p280 = pneg %p98
        $region18: #{tpu_custom_call.1} parent=11 // pred_check_branch
          %282 = sbr.rel (%p280) target = $region20
        $region19: #{tpu_custom_call.1} parent=11 // pred_region
          _
        $region20: #{tpu_custom_call.1} parent=11 // pred_fallthru
          _
        // Predicated region
        $region21: #{tpu_custom_call.1} parent=11 // pred_check
          %p283 = pneg %p119
        $region22: #{tpu_custom_call.1} parent=11 // pred_check_branch
          %285 = sbr.rel (%p283) target = $region24
        $region23: #{tpu_custom_call.1} parent=11 // pred_region
          _
        $region24: #{tpu_custom_call.1} parent=11 // pred_fallthru
          _
        // Predicated region
        $region25: #{tpu_custom_call.1} parent=11 // pred_check
          %p286 = pneg %p140
        $region26: #{tpu_custom_call.1} parent=11 // pred_check_branch
          %288 = sbr.rel (%p286) target = $region28
        $region27: #{tpu_custom_call.1} parent=11 // pred_region
          _
        $region28: #{tpu_custom_call.1} parent=11 // pred_fallthru
          _
        // Predicated region
        $region29: #{tpu_custom_call.1} parent=11 // pred_check
          %p289 = pneg %p166
        $region30: #{tpu_custom_call.1} parent=11 // pred_check_branch
          %291 = sbr.rel (%p289) target = $region32
        $region31: #{tpu_custom_call.1} parent=11 // pred_region
          %p292 = scmp.lt.s32.totalorder %s28, 0
          %s293 = scalar_select %p292, %s28, 0
          %s294 = smul.addr %s293, 4
          %s295 = scalar_lea.vmem %s5, %s294
        $region32: #{tpu_custom_call.1} parent=11 // pred_fallthru
          _
        // Predicated region
        $region33: #{tpu_custom_call.1} parent=11 // pred_check
          %p296 = pneg %p192
        $region34: #{tpu_custom_call.1} parent=11 // pred_check_branch
          %298 = sbr.rel (%p296) target = $region36
        $region35: #{tpu_custom_call.1} parent=11 // pred_region
          %p299 = scmp.lt.s32.totalorder %s28, 0
          %s300 = scalar_select %p299, %s28, 0
          %s301 = smul.addr %s300, 8
          %s302 = scalar_lea.vmem %s6, %s301
        $region36: #{tpu_custom_call.1} parent=11 // pred_fallthru
          _
        // Predicated region
        $region37: #{tpu_custom_call.1} parent=11 // pred_check
          %p303 = pneg %p213
        $region38: #{tpu_custom_call.1} parent=11 // pred_check_branch
          %305 = sbr.rel (%p303) target = $region40
        $region39: #{tpu_custom_call.1} parent=11 // pred_region
          _
        $region40: #{tpu_custom_call.1} parent=11 // pred_fallthru
          _
        // Predicated region
        $region41: #{tpu_custom_call.1} parent=11 // pred_check
          %p306 = pneg %p234
        $region42: #{tpu_custom_call.1} parent=11 // pred_check_branch
          %308 = sbr.rel (%p306) target = $region44
        $region43: #{tpu_custom_call.1} parent=11 // pred_region
          _
        $region44: #{tpu_custom_call.1} parent=11 // pred_fallthru
          _
      $region12: #{tpu_custom_call.1} parent=5 // pred_fallthru
        _
      %p309 = scmp.lt.s32.totalorder %s18, 2
      // Predicated region
      $region45: #{tpu_custom_call.1} parent=5 // pred_check
        %p310 = pneg %p309
      $region46: #{tpu_custom_call.1} parent=5 // pred_check_branch
        %312 = sbr.rel (%p310) target = $region48
      $region47: #{tpu_custom_call.1} parent=5 // pred_region
        // Predicated region
        $region49: #{tpu_custom_call.1} parent=47 // pred_check
          %p313 = pneg %p50
        $region50: #{tpu_custom_call.1} parent=47 // pred_check_branch
          %315 = sbr.rel (%p313) target = $region52
        $region51: #{tpu_custom_call.1} parent=47 // pred_region
          %p316 = scmp.lt.s32.totalorder %s25, 1
          %s317 = scalar_select %p316, %s25, 1
          %s318 = smul.addr %s317, 4
          %s319 = smul.addr %s318, 8
          %s320 = scalar_lea.vmem %s0, %s319
        $region52: #{tpu_custom_call.1} parent=47 // pred_fallthru
          _
      $region48: #{tpu_custom_call.1} parent=5 // pred_fallthru
        _
      %p321 = scmp.le.s32.totalorder 1, %s18
      %p322 = scmp.lt.s32.totalorder %s18, 3
      %p323 = pnand %p321, %p322
      %p324 = pneg %p323
      // Predicated region
      $region53: #{tpu_custom_call.1} parent=5 // pred_check
        _
      $region54: #{tpu_custom_call.1} parent=5 // pred_check_branch
        %326 = sbr.rel (%p323) target = $region56
      $region55: #{tpu_custom_call.1} parent=5 // pred_region
        %s327 = ssub.s32 %s18, 1
        %p328 = scmp.lt.s32.totalorder %s27, 1
        %s329 = scalar_select %p328, %s27, 1
        %s330 = smul.addr %s329, 4
        %s331 = smul.addr %s330, 8
        %s332 = scalar_lea.vmem %s0, %s331
        %p333 = pneg %p56
        %p334 = pneg %p53
        %p335 = pneg %p77
        %p336 = pneg %p74
        %p337 = pneg %p98
        %p338 = pneg %p95
        %p339 = pneg %p119
        %p340 = pneg %p116
        %p341 = pneg %p140
        %p342 = pneg %p137
        %p343 = scmp.lt.s32.totalorder %s28, 0
        %s344 = scalar_select %p343, %s28, 0
        %s345 = smul.addr %s344, 4
        %s346 = scalar_lea.vmem %s5, %s345
        %p347 = pneg %p166
        %p348 = pneg %p163
        %p349 = scmp.lt.s32.totalorder %s28, 0
        %s350 = scalar_select %p349, %s28, 0
        %s351 = smul.addr %s350, 8
        %s352 = scalar_lea.vmem %s6, %s351
        %p353 = pneg %p192
        %p354 = pneg %p189
        %p355 = pneg %p213
        %p356 = pneg %p210
        %p357 = pneg %p234
        %p358 = pneg %p231
        %p359 = pneg %p262
        %p360 = pneg %p259
        %s361 = sand.u32 %s249, 1
        %s362 = scalar_lea.sflag [#allocation4], %s361
        %s363 = sand.u32 %s249, 1
        %s364 = smul.addr %s363, 256
        %s365 = scalar_lea.vmem [#allocation3], %s364
        %p366 = scmp.lt.s32.totalorder %s27, 1
        %s367 = scalar_select %p366, %s27, 1
        %s368 = smul.addr %s367, 4
        %s369 = smul.addr %s368, 8
        %s370 = scalar_lea.vmem %s0, %s369
        %p371 = scmp.lt.s32.totalorder %s28, 0
        %s372 = scalar_select %p371, %s28, 0
        %s373 = smul.addr %s372, 4
        %s374 = scalar_lea.vmem %s5, %s373
        %p375 = scmp.lt.s32.totalorder %s28, 0
        %s376 = scalar_select %p375, %s28, 0
        %s377 = smul.addr %s376, 8
        %s378 = scalar_lea.vmem %s6, %s377
        %s379 = smul.u32 8, %s28
        %p381 = scmp.eq.s32.totalorder %s28, 0
        // Predicated region
        $region57: #{tpu_custom_call.1} parent=55 // pred_check
          %p382 = pneg %p381
        $region58: #{tpu_custom_call.1} parent=55 // pred_check_branch
          %384 = sbr.rel (%p382) target = $region60
        $region59: #{tpu_custom_call.1} parent=55 // pred_region
          %v385 = vld [vmem:[%s370] sm:$0xff]
          %v386 = vld [vmem:[%s370 + $0x8] sm:$0xff]
          %v387 = vld [vmem:[%s370 + $0x10] sm:$0xff]
          %v388 = vld [vmem:[%s370 + $0x18] sm:$0xff]
          %v389 = vadd.f32 %v385, %v386
          %390 = vadd.xlane.f32.xlu0 %v389
          %v391 = vpop.xlane.xlu0 %390
          %v392 = vadd.f32 %v387, %v388
          %393 = vadd.xlane.f32.xlu0 %v392
          %v394 = vpop.xlane.xlu0 %393
          %v395 = vmul.f32 %v385, %v385
          %v396 = vmul.f32 %v386, %v386
          %v397 = vmul.f32 %v387, %v387
          %v398 = vmul.f32 %v388, %v388
          %v399 = vadd.f32 %v395, %v396
          %400 = vadd.xlane.f32.xlu0 %v399
          %v401 = vpop.xlane.xlu0 %400
          %v402 = vadd.f32 %v397, %v398
          %403 = vadd.xlane.f32.xlu0 %v402
          %v404 = vpop.xlane.xlu0 %403
          %v405 = vld [vmem:[%s3] sm:$0xff]
          %v406 = vld [vmem:[%s3 + $0x8] sm:$0xff]
          %vm407 = vcmask 261120
          %v409 = vsel %vm407, %v405, 0
          %v412 = vsel %vm407, %v406, 0
          %414 = vmatprep.subr.mxu0 0.0
          %415 = vmatpush1.msra.mxu0 %v391
          %416 = vmatprep.subr.mxu0 0.0
          %417 = vmatpush1.msra.mxu0 %v394
          %418 = vmatprep.subr.mxu0 0.0
          %419 = vmatpush1.msra.mxu0 %v401
          %420 = vmatprep.subr.mxu0 0.0
          %421 = vmatpush1.msra.mxu0 %v404
          %422 = vmatprep.subr.mxu0 0.0
          %423 = vmatpush1.msra.mxu0 0.0
          %424 = vmatprep.subr.mxu0 0.0
          %425 = vmatpush1.msra.mxu0 0.0
          %426 = vmatprep.subr.mxu0 0.0
          %427 = vmatpush1.msra.mxu0 0.0
          %428 = vmatprep.subr.mxu0 0.0
          %429 = vmatpush1.msra.mxu0 0.0
          %430 = vmatprep.subr.mxu0 0.0
          %431 = vmatpush1.msra.mxu0 0.0
          %432 = vmatprep.subr.mxu0 0.0
          %433 = vmatpush1.msra.mxu0 0.0
          %434 = vmatprep.subr.mxu0 0.0
          %435 = vmatpush1.msra.mxu0 0.0
          %436 = vmatprep.subr.mxu0 0.0
          %437 = vmatpush1.msra.mxu0 0.0
          %438 = vmatprep.subr.mxu0 0.0
          %439 = vmatpush1.msra.mxu0 0.0
          %440 = vmatprep.subr.mxu0 0.0
          %441 = vmatpush1.msra.mxu0 0.0
          %442 = vmatprep.subr.mxu0 0.0
          %443 = vmatpush1.msra.mxu0 0.0
          %444 = vmatprep.subr.mxu0 0.0
          %445 = vmatpush1.msra.mxu0 0.0
          %446 = vmatprep.subr.mxu0 0.0
          %447 = vmatpush1.msra.mxu0 0.0
          %448 = vmatprep.subr.mxu0 0.0
          %449 = vmatpush1.msra.mxu0 0.0
          %450 = vmatprep.subr.mxu0 0.0
          %451 = vmatpush1.msra.mxu0 0.0
          %452 = vmatprep.subr.mxu0 0.0
          %453 = vmatpush1.msra.mxu0 0.0
          %454 = vmatprep.subr.mxu0 0.0
          %455 = vmatpush1.msra.mxu0 0.0
          %456 = vmatprep.subr.mxu0 0.0
          %457 = vmatpush1.msra.mxu0 0.0
          %458 = vmatprep.subr.mxu0 0.0
          %459 = vmatpush1.msra.mxu0 0.0
          %460 = vmatprep.subr.mxu0 0.0
          %461 = vmatpush1.msra.mxu0 0.0
          %462 = vmatprep.subr.mxu0 0.0
          %463 = vmatpush1.msra.mxu0 0.0
          %464 = vmatprep.subr.mxu0 0.0
          %465 = vmatpush1.msra.mxu0 0.0
          %466 = vmatprep.subr.mxu0 0.0
          %467 = vmatpush1.msra.mxu0 0.0
          %468 = vmatprep.subr.mxu0 0.0
          %469 = vmatpush1.msra.mxu0 0.0
          %470 = vmatprep.subr.mxu0 0.0
          %471 = vmatpush1.msra.mxu0 0.0
          %472 = vmatprep.subr.mxu0 0.0
          %473 = vmatpush1.msra.mxu0 0.0
          %474 = vmatprep.subr.mxu0 0.0
          %475 = vmatpush1.msra.mxu0 0.0
          %476 = vmatprep.subr.mxu0 0.0
          %477 = vmatpush1.msra.mxu0 0.0
          %478 = vmatprep.mubr.f32.mxu0 0.0
          %479 = vmatmul.mubr.f32.gmra.mrb[0].mxu0 %v409
          %v480 = vpop.f32.mrb[0].mxu0
          %v481 = vadd.f32 0.0, %v480
          %v482 = vpop.f32.mrb[0].mxu0
          %483 = vmatprep.mubr.f32.mxu0 0.0
          %484 = vmatmul.mubr.f32.gmra.mrb[0].mxu0 %v412
          %v485 = vpop.f32.mrb[0].mxu0
          %v486 = vadd.f32 0.0, %v485
          %v487 = vpop.f32.mrb[0].mxu0
          %488 = vdwg.mxu0
          %v489 = vmul.f32 %v481, 0.001953125
          %v490 = vmul.f32 %v486, 0.001953125
          %v491 = vmul.f32 %v489, %v489
          %v492 = vsub.f32 %v490, %v491
          %v493 = vmax.f32 %v492, 0.0
          %v494 = vadd.f32 %v493, 1e-05
          %v495 = vrsqrt.pop %v494
          %v496 = vld [vmem:[%s4] sm:$0xff]
          %v497 = vld [vmem:[%s4 + $0x8] sm:$0xff]
          %v498 = vld [vmem:[%s4 + $0x10] sm:$0xff]
          %v499 = vld [vmem:[%s4 + $0x18] sm:$0xff]
          %vm500 = vcmask 130048
          %v502 = vsel %vm500, %v496, 0
          %v505 = vsel %vm500, %v497, 0
          %v508 = vsel %vm500, %v498, 0
          %v511 = vsel %vm500, %v499, 0
          %513 = vmatprep.subr.mxu0 0.0
          %514 = vmatpush1.msra.mxu0 %v489
          %515 = vmatprep.subr.mxu0 0.0
          %516 = vmatpush1.msra.mxu0 %v495
          %517 = vmatprep.subr.mxu0 0.0
          %518 = vmatpush1.msra.mxu0 0.0
          %519 = vmatprep.subr.mxu0 0.0
          %520 = vmatpush1.msra.mxu0 0.0
          %521 = vmatprep.subr.mxu0 0.0
          %522 = vmatpush1.msra.mxu0 0.0
          %523 = vmatprep.subr.mxu0 0.0
          %524 = vmatpush1.msra.mxu0 0.0
          %525 = vmatprep.subr.mxu0 0.0
          %526 = vmatpush1.msra.mxu0 0.0
          %527 = vmatprep.subr.mxu0 0.0
          %528 = vmatpush1.msra.mxu0 0.0
          %529 = vmatprep.subr.mxu0 0.0
          %530 = vmatpush1.msra.mxu0 0.0
          %531 = vmatprep.subr.mxu0 0.0
          %532 = vmatpush1.msra.mxu0 0.0
          %533 = vmatprep.subr.mxu0 0.0
          %534 = vmatpush1.msra.mxu0 0.0
          %535 = vmatprep.subr.mxu0 0.0
          %536 = vmatpush1.msra.mxu0 0.0
          %537 = vmatprep.subr.mxu0 0.0
          %538 = vmatpush1.msra.mxu0 0.0
          %539 = vmatprep.subr.mxu0 0.0
          %540 = vmatpush1.msra.mxu0 0.0
          %541 = vmatprep.subr.mxu0 0.0
          %542 = vmatpush1.msra.mxu0 0.0
          %543 = vmatprep.subr.mxu0 0.0
          %544 = vmatpush1.msra.mxu0 0.0
          %545 = vmatprep.subr.mxu0 0.0
          %546 = vmatpush1.msra.mxu0 0.0
          %547 = vmatprep.subr.mxu0 0.0
          %548 = vmatpush1.msra.mxu0 0.0
          %549 = vmatprep.subr.mxu0 0.0
          %550 = vmatpush1.msra.mxu0 0.0
          %551 = vmatprep.subr.mxu0 0.0
          %552 = vmatpush1.msra.mxu0 0.0
          %553 = vmatprep.subr.mxu0 0.0
          %554 = vmatpush1.msra.mxu0 0.0
          %555 = vmatprep.subr.mxu0 0.0
          %556 = vmatpush1.msra.mxu0 0.0
          %557 = vmatprep.subr.mxu0 0.0
          %558 = vmatpush1.msra.mxu0 0.0
          %559 = vmatprep.subr.mxu0 0.0
          %560 = vmatpush1.msra.mxu0 0.0
          %561 = vmatprep.subr.mxu0 0.0
          %562 = vmatpush1.msra.mxu0 0.0
          %563 = vmatprep.subr.mxu0 0.0
          %564 = vmatpush1.msra.mxu0 0.0
          %565 = vmatprep.subr.mxu0 0.0
          %566 = vmatpush1.msra.mxu0 0.0
          %567 = vmatprep.subr.mxu0 0.0
          %568 = vmatpush1.msra.mxu0 0.0
          %569 = vmatprep.subr.mxu0 0.0
          %570 = vmatpush1.msra.mxu0 0.0
          %571 = vmatprep.subr.mxu0 0.0
          %572 = vmatpush1.msra.mxu0 0.0
          %573 = vmatprep.subr.mxu0 0.0
          %574 = vmatpush1.msra.mxu0 0.0
          %575 = vmatprep.subr.mxu0 0.0
          %576 = vmatpush1.msra.mxu0 0.0
          %577 = vmatprep.mubr.f32.mxu0 0.0
          %578 = vmatmul.mubr.f32.gmra.mrb[0].mxu0 %v502
          %v579 = vpop.f32.mrb[0].mxu0
          %v580 = vadd.f32 0.0, %v579
          %v581 = vpop.f32.mrb[0].mxu0
          %582 = vmatprep.mubr.f32.mxu0 0.0
          %583 = vmatmul.mubr.f32.gmra.mrb[0].mxu0 %v505
          %v584 = vpop.f32.mrb[0].mxu0
          %v585 = vadd.f32 0.0, %v584
          %v586 = vpop.f32.mrb[0].mxu0
          %587 = vmatprep.mubr.f32.mxu0 0.0
          %588 = vmatmul.mubr.f32.gmra.mrb[0].mxu0 %v508
          %v589 = vpop.f32.mrb[0].mxu0
          %v590 = vadd.f32 0.0, %v589
          %v591 = vpop.f32.mrb[0].mxu0
          %592 = vmatprep.mubr.f32.mxu0 0.0
          %593 = vmatmul.mubr.f32.gmra.mrb[0].mxu0 %v511
          %v594 = vpop.f32.mrb[0].mxu0
          %v595 = vadd.f32 0.0, %v594
          %v596 = vpop.f32.mrb[0].mxu0
          %597 = vdwg.mxu0
          %v598 = vld [vmem:[%s1] sm:$0xff]
          %v599 = vld [vmem:[%s1 + $0x8] sm:$0xff]
          %v600 = vmul.f32 %v590, %v598
          %v601 = vmul.f32 %v595, %v599
          %v602 = vld [vmem:[%s2] sm:$0xff]
          %v603 = vld [vmem:[%s2 + $0x8] sm:$0xff]
          %v604 = vmul.f32 %v580, %v600
          %v605 = vmul.f32 %v585, %v601
          %v606 = vsub.f32 %v602, %v604
          %v607 = vsub.f32 %v603, %v605
          %609 = vset.pattern.permute.xlu0 0
          %610 = vperm.xlu0 %609, %v600
          %v611 = vpop.permute.xlu0 %610
          %614 = vset.pattern.permute.xlu0 0
          %615 = vperm.xlu0 %614, %v601
          %v616 = vpop.permute.xlu0 %615
          %v618 = vmul.f32 %v611, %v385
          %v619 = vmul.f32 %v611, %v386
          %v620 = vmul.f32 %v616, %v387
          %v621 = vmul.f32 %v616, %v388
          %623 = vset.pattern.permute.xlu0 0
          %624 = vperm.xlu0 %623, %v606
          %v625 = vpop.permute.xlu0 %624
          %628 = vset.pattern.permute.xlu0 0
          %629 = vperm.xlu0 %628, %v607
          %v630 = vpop.permute.xlu0 %629
          %v632 = vadd.f32 %v618, %v625
          %v633 = vadd.f32 %v619, %v625
          %v634 = vadd.f32 %v620, %v630
          %v635 = vadd.f32 %v621, %v630
          %vm636 = vcmp.gt.f32.partialorder %v632, 0.0
          %vm637 = vcmp.gt.f32.partialorder %v633, 0.0
          %vm638 = vcmp.gt.f32.partialorder %v634, 0.0
          %vm639 = vcmp.gt.f32.partialorder %v635, 0.0
          %v640 = vmul.f32 %v632, 0.2
          %v641 = vmul.f32 %v633, 0.2
          %v642 = vmul.f32 %v634, 0.2
          %v643 = vmul.f32 %v635, 0.2
          %v644 = vsel %vm636, %v632, %v640
          %v645 = vsel %vm637, %v633, %v641
          %v646 = vsel %vm638, %v634, %v642
          %v647 = vsel %vm639, %v635, %v643
          %v648 = vpack.c.bf16 %v646, %v644
          %v649 = vpack.c.bf16 %v647, %v645
          %650 = vst [vmem:[#allocation2] sm:$0xff] %v648
          %651 = vst [vmem:[#allocation2 + $0x8] sm:$0xff] %v649
        $region60: #{tpu_custom_call.1} parent=55 // pred_fallthru
          _
        %v652 = vld [vmem:[%s374] sm:$0xf]
        %v653 = vld [vmem:[#allocation2] sm:$0xff]
        %v654 = vld [vmem:[#allocation2 + $0x8] sm:$0xff]
        %v655 = vld [vmem:[%s378] sm:$0xff]
        %657 = vset.pattern.permute.xlu0 0
        %658 = vperm.xlu0 %657, %v655
        %v659 = vpop.permute.xlu0 %658
        %vm661 = vcmask 130048
        %v663 = vsel %vm661, %v652, 0
        %665 = vmatprep.subr.bf16.mxu0 %v654
        %666 = vmatpush1.bf16.msra.mxu0 %v653
        %667 = vmatprep.subr.bf16.mxu0 0
        %668 = vmatpush1.bf16.msra.mxu0 0
        %669 = vmatprep.subr.bf16.mxu0 0
        %670 = vmatpush1.bf16.msra.mxu0 0
        %671 = vmatprep.subr.bf16.mxu0 0
        %672 = vmatpush1.bf16.msra.mxu0 0
        %673 = vmatprep.subr.bf16.mxu0 0
        %674 = vmatpush1.bf16.msra.mxu0 0
        %675 = vmatprep.subr.bf16.mxu0 0
        %676 = vmatpush1.bf16.msra.mxu0 0
        %677 = vmatprep.subr.bf16.mxu0 0
        %678 = vmatpush1.bf16.msra.mxu0 0
        %679 = vmatprep.subr.bf16.mxu0 0
        %680 = vmatpush1.bf16.msra.mxu0 0
        %681 = vmatprep.subr.bf16.mxu0 0
        %682 = vmatpush1.bf16.msra.mxu0 0
        %683 = vmatprep.subr.bf16.mxu0 0
        %684 = vmatpush1.bf16.msra.mxu0 0
        %685 = vmatprep.subr.bf16.mxu0 0
        %686 = vmatpush1.bf16.msra.mxu0 0
        %687 = vmatprep.subr.bf16.mxu0 0
        %688 = vmatpush1.bf16.msra.mxu0 0
        %689 = vmatprep.subr.bf16.mxu0 0
        %690 = vmatpush1.bf16.msra.mxu0 0
        %691 = vmatprep.subr.bf16.mxu0 0
        %692 = vmatpush1.bf16.msra.mxu0 0
        %693 = vmatprep.subr.bf16.mxu0 0
        %694 = vmatpush1.bf16.msra.mxu0 0
        %695 = vmatprep.subr.bf16.mxu0 0
        %696 = vmatpush1.bf16.msra.mxu0 0
        %697 = vmatprep.mubr.bf16.mxu0 0
        %698 = vmatmul.mubr.bf16.gmra.mrb[0].mxu0 %v663
        %v699 = vpop.f32.mrb[0].mxu0
        %v700 = vadd.f32 %v659, %v699
        %v701 = vpop.f32.mrb[0].mxu0
        %v702 = vadd.f32 %v659, %v701
        %v703 = vpop.f32.mrb[0].mxu0
        %v704 = vpop.f32.mrb[0].mxu0
        %705 = vdwg.mxu0
        %707 = vrot.lane.b32.xlu0 %v700, 112
        %v708 = vpop.permute.xlu0 %707
        %710 = vrot.lane.b32.xlu0 %v700, 96
        %v711 = vpop.permute.xlu0 %710
        %713 = vrot.lane.b32.xlu0 %v700, 80
        %v714 = vpop.permute.xlu0 %713
        %716 = vrot.lane.b32.xlu0 %v700, 64
        %v717 = vpop.permute.xlu0 %716
        %719 = vrot.lane.b32.xlu0 %v700, 48
        %v720 = vpop.permute.xlu0 %719
        %722 = vrot.lane.b32.xlu0 %v700, 32
        %v723 = vpop.permute.xlu0 %722
        %725 = vrot.lane.b32.xlu0 %v700, 16
        %v726 = vpop.permute.xlu0 %725
        %729 = vrot.lane.b32.xlu0 %v702, 112
        %v730 = vpop.permute.xlu0 %729
        %732 = vrot.lane.b32.xlu0 %v702, 96
        %v733 = vpop.permute.xlu0 %732
        %735 = vrot.lane.b32.xlu0 %v702, 80
        %v736 = vpop.permute.xlu0 %735
        %738 = vrot.lane.b32.xlu0 %v702, 64
        %v739 = vpop.permute.xlu0 %738
        %741 = vrot.lane.b32.xlu0 %v702, 48
        %v742 = vpop.permute.xlu0 %741
        %744 = vrot.lane.b32.xlu0 %v702, 32
        %v745 = vpop.permute.xlu0 %744
        %747 = vrot.lane.b32.xlu0 %v702, 16
        %v748 = vpop.permute.xlu0 %747
        %v750 = vcombine.low %v700, %v711
        %v751 = vcombine.high %v700, %v711
        %v753 = vunpack.c.l.s4 1983009808
        %v754 = vunpack.c.0.s8 %v753
        %v755 = vlaneseq
        %v756 = vshrl.u32 %v755, 7
        %v757 = vsub.s32 %v754, %v756
        %v758 = vrot.slane %v750, %v757
        %v760 = vunpack.c.l.s4 1983009808
        %v761 = vunpack.c.0.s8 %v760
        %v762 = vlaneseq
        %v763 = vshrl.u32 %v762, 7
        %v764 = vsub.s32 %v761, %v763
        %v765 = vrot.slane %v751, %v764
        %v766 = vcombine.low %v708, %v714
        %v767 = vcombine.high %v708, %v714
        %v769 = vunpack.c.l.s4 1983009808
        %v770 = vunpack.c.0.s8 %v769
        %v771 = vlaneseq
        %v772 = vshrl.u32 %v771, 7
        %v773 = vsub.s32 %v770, %v772
        %v774 = vrot.slane %v766, %v773
        %v776 = vunpack.c.l.s4 1983009808
        %v777 = vunpack.c.0.s8 %v776
        %v778 = vlaneseq
        %v779 = vshrl.u32 %v778, 7
        %v780 = vsub.s32 %v777, %v779
        %v781 = vrot.slane %v767, %v780
        %v782 = vcombine.low %v717, %v723
        %v783 = vcombine.high %v717, %v723
        %v785 = vunpack.c.l.s4 1983009808
        %v786 = vunpack.c.0.s8 %v785
        %v787 = vlaneseq
        %v788 = vshrl.u32 %v787, 7
        %v789 = vsub.s32 %v786, %v788
        %v790 = vrot.slane %v782, %v789
        %v792 = vunpack.c.l.s4 1983009808
        %v793 = vunpack.c.0.s8 %v792
        %v794 = vlaneseq
        %v795 = vshrl.u32 %v794, 7
        %v796 = vsub.s32 %v793, %v795
        %v797 = vrot.slane %v783, %v796
        %v798 = vcombine.low %v720, %v726
        %v799 = vcombine.high %v720, %v726
        %v801 = vunpack.c.l.s4 1983009808
        %v802 = vunpack.c.0.s8 %v801
        %v803 = vlaneseq
        %v804 = vshrl.u32 %v803, 7
        %v805 = vsub.s32 %v802, %v804
        %v806 = vrot.slane %v798, %v805
        %v808 = vunpack.c.l.s4 1983009808
        %v809 = vunpack.c.0.s8 %v808
        %v810 = vlaneseq
        %v811 = vshrl.u32 %v810, 7
        %v812 = vsub.s32 %v809, %v811
        %v813 = vrot.slane %v799, %v812
        %v814 = vcombine.low %v758, %v774
        %v815 = vcombine.high %v758, %v774
        %v817 = vunpack.c.l.s4 1934713408
        %v818 = vunpack.c.0.s8 %v817
        %v819 = vlaneseq
        %v820 = vshrl.u32 %v819, 7
        %v821 = vsub.s32 %v818, %v820
        %v822 = vrot.slane %v814, %v821
        %v824 = vunpack.c.l.s4 1934713408
        %v825 = vunpack.c.0.s8 %v824
        %v826 = vlaneseq
        %v827 = vshrl.u32 %v826, 7
        %v828 = vsub.s32 %v825, %v827
        %v829 = vrot.slane %v815, %v828
        %v830 = vcombine.low %v765, %v781
        %v831 = vcombine.high %v765, %v781
        %v833 = vunpack.c.l.s4 1934713408
        %v834 = vunpack.c.0.s8 %v833
        %v835 = vlaneseq
        %v836 = vshrl.u32 %v835, 7
        %v837 = vsub.s32 %v834, %v836
        %v838 = vrot.slane %v830, %v837
        %v840 = vunpack.c.l.s4 1934713408
        %v841 = vunpack.c.0.s8 %v840
        %v842 = vlaneseq
        %v843 = vshrl.u32 %v842, 7
        %v844 = vsub.s32 %v841, %v843
        %v845 = vrot.slane %v831, %v844
        %v846 = vcombine.low %v790, %v806
        %v847 = vcombine.high %v790, %v806
        %v849 = vunpack.c.l.s4 1934713408
        %v850 = vunpack.c.0.s8 %v849
        %v851 = vlaneseq
        %v852 = vshrl.u32 %v851, 7
        %v853 = vsub.s32 %v850, %v852
        %v854 = vrot.slane %v846, %v853
        %v856 = vunpack.c.l.s4 1934713408
        %v857 = vunpack.c.0.s8 %v856
        %v858 = vlaneseq
        %v859 = vshrl.u32 %v858, 7
        %v860 = vsub.s32 %v857, %v859
        %v861 = vrot.slane %v847, %v860
        %v862 = vcombine.low %v797, %v813
        %v863 = vcombine.high %v797, %v813
        %v865 = vunpack.c.l.s4 1934713408
        %v866 = vunpack.c.0.s8 %v865
        %v867 = vlaneseq
        %v868 = vshrl.u32 %v867, 7
        %v869 = vsub.s32 %v866, %v868
        %v870 = vrot.slane %v862, %v869
        %v872 = vunpack.c.l.s4 1934713408
        %v873 = vunpack.c.0.s8 %v872
        %v874 = vlaneseq
        %v875 = vshrl.u32 %v874, 7
        %v876 = vsub.s32 %v873, %v875
        %v877 = vrot.slane %v863, %v876
        %v878 = vcombine.low %v822, %v854
        %v879 = vcombine.high %v822, %v854
        %v880 = vcombine.low %v829, %v861
        %v881 = vcombine.high %v829, %v861
        %v882 = vcombine.low %v838, %v870
        %v883 = vcombine.high %v838, %v870
        %v884 = vcombine.low %v845, %v877
        %v885 = vcombine.high %v845, %v877
        %v886 = vcombine.low %v702, %v733
        %v887 = vcombine.high %v702, %v733
        %v889 = vunpack.c.l.s4 1983009808
        %v890 = vunpack.c.0.s8 %v889
        %v891 = vlaneseq
        %v892 = vshrl.u32 %v891, 7
        %v893 = vsub.s32 %v890, %v892
        %v894 = vrot.slane %v886, %v893
        %v896 = vunpack.c.l.s4 1983009808
        %v897 = vunpack.c.0.s8 %v896
        %v898 = vlaneseq
        %v899 = vshrl.u32 %v898, 7
        %v900 = vsub.s32 %v897, %v899
        %v901 = vrot.slane %v887, %v900
        %v902 = vcombine.low %v730, %v736
        %v903 = vcombine.high %v730, %v736
        %v905 = vunpack.c.l.s4 1983009808
        %v906 = vunpack.c.0.s8 %v905
        %v907 = vlaneseq
        %v908 = vshrl.u32 %v907, 7
        %v909 = vsub.s32 %v906, %v908
        %v910 = vrot.slane %v902, %v909
        %v912 = vunpack.c.l.s4 1983009808
        %v913 = vunpack.c.0.s8 %v912
        %v914 = vlaneseq
        %v915 = vshrl.u32 %v914, 7
        %v916 = vsub.s32 %v913, %v915
        %v917 = vrot.slane %v903, %v916
        %v918 = vcombine.low %v739, %v745
        %v919 = vcombine.high %v739, %v745
        %v921 = vunpack.c.l.s4 1983009808
        %v922 = vunpack.c.0.s8 %v921
        %v923 = vlaneseq
        %v924 = vshrl.u32 %v923, 7
        %v925 = vsub.s32 %v922, %v924
        %v926 = vrot.slane %v918, %v925
        %v928 = vunpack.c.l.s4 1983009808
        %v929 = vunpack.c.0.s8 %v928
        %v930 = vlaneseq
        %v931 = vshrl.u32 %v930, 7
        %v932 = vsub.s32 %v929, %v931
        %v933 = vrot.slane %v919, %v932
        %v934 = vcombine.low %v742, %v748
        %v935 = vcombine.high %v742, %v748
        %v937 = vunpack.c.l.s4 1983009808
        %v938 = vunpack.c.0.s8 %v937
        %v939 = vlaneseq
        %v940 = vshrl.u32 %v939, 7
        %v941 = vsub.s32 %v938, %v940
        %v942 = vrot.slane %v934, %v941
        %v944 = vunpack.c.l.s4 1983009808
        %v945 = vunpack.c.0.s8 %v944
        %v946 = vlaneseq
        %v947 = vshrl.u32 %v946, 7
        %v948 = vsub.s32 %v945, %v947
        %v949 = vrot.slane %v935, %v948
        %v950 = vcombine.low %v894, %v910
        %v951 = vcombine.high %v894, %v910
        %v953 = vunpack.c.l.s4 1934713408
        %v954 = vunpack.c.0.s8 %v953
        %v955 = vlaneseq
        %v956 = vshrl.u32 %v955, 7
        %v957 = vsub.s32 %v954, %v956
        %v958 = vrot.slane %v950, %v957
        %v960 = vunpack.c.l.s4 1934713408
        %v961 = vunpack.c.0.s8 %v960
        %v962 = vlaneseq
        %v963 = vshrl.u32 %v962, 7
        %v964 = vsub.s32 %v961, %v963
        %v965 = vrot.slane %v951, %v964
        %v966 = vcombine.low %v901, %v917
        %v967 = vcombine.high %v901, %v917
        %v969 = vunpack.c.l.s4 1934713408
        %v970 = vunpack.c.0.s8 %v969
        %v971 = vlaneseq
        %v972 = vshrl.u32 %v971, 7
        %v973 = vsub.s32 %v970, %v972
        %v974 = vrot.slane %v966, %v973
        %v976 = vunpack.c.l.s4 1934713408
        %v977 = vunpack.c.0.s8 %v976
        %v978 = vlaneseq
        %v979 = vshrl.u32 %v978, 7
        %v980 = vsub.s32 %v977, %v979
        %v981 = vrot.slane %v967, %v980
        %v982 = vcombine.low %v926, %v942
        %v983 = vcombine.high %v926, %v942
        %v985 = vunpack.c.l.s4 1934713408
        %v986 = vunpack.c.0.s8 %v985
        %v987 = vlaneseq
        %v988 = vshrl.u32 %v987, 7
        %v989 = vsub.s32 %v986, %v988
        %v990 = vrot.slane %v982, %v989
        %v992 = vunpack.c.l.s4 1934713408
        %v993 = vunpack.c.0.s8 %v992
        %v994 = vlaneseq
        %v995 = vshrl.u32 %v994, 7
        %v996 = vsub.s32 %v993, %v995
        %v997 = vrot.slane %v983, %v996
        %v998 = vcombine.low %v933, %v949
        %v999 = vcombine.high %v933, %v949
        %v1001 = vunpack.c.l.s4 1934713408
        %v1002 = vunpack.c.0.s8 %v1001
        %v1003 = vlaneseq
        %v1004 = vshrl.u32 %v1003, 7
        %v1005 = vsub.s32 %v1002, %v1004
        %v1006 = vrot.slane %v998, %v1005
        %v1008 = vunpack.c.l.s4 1934713408
        %v1009 = vunpack.c.0.s8 %v1008
        %v1010 = vlaneseq
        %v1011 = vshrl.u32 %v1010, 7
        %v1012 = vsub.s32 %v1009, %v1011
        %v1013 = vrot.slane %v999, %v1012
        %v1014 = vcombine.low %v958, %v990
        %v1015 = vcombine.high %v958, %v990
        %v1016 = vcombine.low %v965, %v997
        %v1017 = vcombine.high %v965, %v997
        %v1018 = vcombine.low %v974, %v1006
        %v1019 = vcombine.high %v974, %v1006
        %v1020 = vcombine.low %v981, %v1013
        %v1021 = vcombine.high %v981, %v1013
        %v1022 = vpack.c.bf16 %v1014, %v878
        %v1023 = vpack.c.bf16 %v1015, %v879
        %v1024 = vpack.c.bf16 %v1016, %v880
        %v1025 = vpack.c.bf16 %v1017, %v881
        %v1026 = vpack.c.bf16 %v1018, %v882
        %v1027 = vpack.c.bf16 %v1019, %v883
        %v1028 = vpack.c.bf16 %v1020, %v884
        %v1029 = vpack.c.bf16 %v1021, %v885
        %v1030 = vld [vmem:[%s7] sm:$0xf]
        %v1031 = vld [vmem:[%s7 + $0x4] sm:$0xf]
        %v1032 = vld [vmem:[%s7 + $0x8] sm:$0xf]
        %v1033 = vld [vmem:[%s7 + $0xc] sm:$0xf]
        %v1038 = vunpack.c.l.b16 %v1030
        %v1039 = vunpack.c.l.b16 %v1031
        %v1040 = vunpack.c.l.b16 %v1032
        %v1041 = vunpack.c.l.b16 %v1033
        %v1042 = vpack.c.b16 %v1039, %v1038
        %v1043 = vpack.c.b16 %v1041, %v1040
        %v1045 = vsel %vm661, %v1042, 0
        %v1048 = vsel %vm661, %v1043, 0
        %1050 = vmatprep.subr.bf16.mxu0 0
        %1051 = vmatpush1.bf16.msra.mxu0 %v1022
        %1052 = vmatprep.subr.bf16.mxu0 0
        %1053 = vmatpush1.bf16.msra.mxu0 0
        %1054 = vmatprep.subr.bf16.mxu0 0
        %1055 = vmatpush1.bf16.msra.mxu0 0
        %1056 = vmatprep.subr.bf16.mxu0 0
        %1057 = vmatpush1.bf16.msra.mxu0 0
        %1058 = vmatprep.subr.bf16.mxu0 0
        %1059 = vmatpush1.bf16.msra.mxu0 0
        %1060 = vmatprep.subr.bf16.mxu0 0
        %1061 = vmatpush1.bf16.msra.mxu0 0
        %1062 = vmatprep.subr.bf16.mxu0 0
        %1063 = vmatpush1.bf16.msra.mxu0 0
        %1064 = vmatprep.subr.bf16.mxu0 0
        %1065 = vmatpush1.bf16.msra.mxu0 0
        %1066 = vmatprep.subr.bf16.mxu0 0
        %1067 = vmatpush1.bf16.msra.mxu0 0
        %1068 = vmatprep.subr.bf16.mxu0 0
        %1069 = vmatpush1.bf16.msra.mxu0 0
        %1070 = vmatprep.subr.bf16.mxu0 0
        %1071 = vmatpush1.bf16.msra.mxu0 0
        %1072 = vmatprep.subr.bf16.mxu0 0
        %1073 = vmatpush1.bf16.msra.mxu0 0
        %1074 = vmatprep.subr.bf16.mxu0 0
        %1075 = vmatpush1.bf16.msra.mxu0 0
        %1076 = vmatprep.subr.bf16.mxu0 0
        %1077 = vmatpush1.bf16.msra.mxu0 0
        %1078 = vmatprep.subr.bf16.mxu0 0
        %1079 = vmatpush1.bf16.msra.mxu0 0
        %1080 = vmatprep.subr.bf16.mxu0 0
        %1081 = vmatpush1.bf16.msra.mxu0 0
        %1082 = vmatprep.mubr.bf16.mxu0 0
        %1083 = vmatmul.mubr.bf16.gmra.mrb[0].mxu0 %v1045
        %v1084 = vpop.f32.mrb[0].mxu0
        %v1085 = vadd.f32 0.0, %v1084
        %v1086 = vpop.f32.mrb[0].mxu0
        %v1087 = vpop.f32.mrb[0].mxu0
        %v1088 = vadd.f32 0.0, %v1087
        %v1089 = vpop.f32.mrb[0].mxu0
        %1090 = vmatprep.mubr.bf16.mxu0 0
        %1091 = vmatmul.mubr.bf16.gmra.mrb[0].mxu0 %v1048
        %v1092 = vpop.f32.mrb[0].mxu0
        %v1093 = vadd.f32 0.0, %v1092
        %v1094 = vpop.f32.mrb[0].mxu0
        %v1095 = vpop.f32.mrb[0].mxu0
        %v1096 = vadd.f32 0.0, %v1095
        %v1097 = vpop.f32.mrb[0].mxu0
        %1098 = vdwg.mxu0
        %1099 = vmatprep.subr.bf16.mxu0 0
        %1100 = vmatpush1.bf16.msra.mxu0 %v1023
        %1101 = vmatprep.subr.bf16.mxu0 0
        %1102 = vmatpush1.bf16.msra.mxu0 0
        %1103 = vmatprep.subr.bf16.mxu0 0
        %1104 = vmatpush1.bf16.msra.mxu0 0
        %1105 = vmatprep.subr.bf16.mxu0 0
        %1106 = vmatpush1.bf16.msra.mxu0 0
        %1107 = vmatprep.subr.bf16.mxu0 0
        %1108 = vmatpush1.bf16.msra.mxu0 0
        %1109 = vmatprep.subr.bf16.mxu0 0
        %1110 = vmatpush1.bf16.msra.mxu0 0
        %1111 = vmatprep.subr.bf16.mxu0 0
        %1112 = vmatpush1.bf16.msra.mxu0 0
        %1113 = vmatprep.subr.bf16.mxu0 0
        %1114 = vmatpush1.bf16.msra.mxu0 0
        %1115 = vmatprep.subr.bf16.mxu0 0
        %1116 = vmatpush1.bf16.msra.mxu0 0
        %1117 = vmatprep.subr.bf16.mxu0 0
        %1118 = vmatpush1.bf16.msra.mxu0 0
        %1119 = vmatprep.subr.bf16.mxu0 0
        %1120 = vmatpush1.bf16.msra.mxu0 0
        %1121 = vmatprep.subr.bf16.mxu0 0
        %1122 = vmatpush1.bf16.msra.mxu0 0
        %1123 = vmatprep.subr.bf16.mxu0 0
        %1124 = vmatpush1.bf16.msra.mxu0 0
        %1125 = vmatprep.subr.bf16.mxu0 0
        %1126 = vmatpush1.bf16.msra.mxu0 0
        %1127 = vmatprep.subr.bf16.mxu0 0
        %1128 = vmatpush1.bf16.msra.mxu0 0
        %1129 = vmatprep.subr.bf16.mxu0 0
        %1130 = vmatpush1.bf16.msra.mxu0 0
        %1131 = vmatprep.mubr.bf16.mxu0 0
        %1132 = vmatmul.mubr.bf16.gmra.mrb[0].mxu0 %v1045
        %v1133 = vpop.f32.mrb[0].mxu0
        %v1134 = vadd.f32 0.0, %v1133
        %v1135 = vpop.f32.mrb[0].mxu0
        %v1136 = vpop.f32.mrb[0].mxu0
        %v1137 = vadd.f32 0.0, %v1136
        %v1138 = vpop.f32.mrb[0].mxu0
        %1139 = vmatprep.mubr.bf16.mxu0 0
        %1140 = vmatmul.mubr.bf16.gmra.mrb[0].mxu0 %v1048
        %v1141 = vpop.f32.mrb[0].mxu0
        %v1142 = vadd.f32 0.0, %v1141
        %v1143 = vpop.f32.mrb[0].mxu0
        %v1144 = vpop.f32.mrb[0].mxu0
        %v1145 = vadd.f32 0.0, %v1144
        %v1146 = vpop.f32.mrb[0].mxu0
        %1147 = vdwg.mxu0
        %1148 = vmatprep.subr.bf16.mxu0 0
        %1149 = vmatpush1.bf16.msra.mxu0 %v1024
        %1150 = vmatprep.subr.bf16.mxu0 0
        %1151 = vmatpush1.bf16.msra.mxu0 0
        %1152 = vmatprep.subr.bf16.mxu0 0
        %1153 = vmatpush1.bf16.msra.mxu0 0
        %1154 = vmatprep.subr.bf16.mxu0 0
        %1155 = vmatpush1.bf16.msra.mxu0 0
        %1156 = vmatprep.subr.bf16.mxu0 0
        %1157 = vmatpush1.bf16.msra.mxu0 0
        %1158 = vmatprep.subr.bf16.mxu0 0
        %1159 = vmatpush1.bf16.msra.mxu0 0
        %1160 = vmatprep.subr.bf16.mxu0 0
        %1161 = vmatpush1.bf16.msra.mxu0 0
        %1162 = vmatprep.subr.bf16.mxu0 0
        %1163 = vmatpush1.bf16.msra.mxu0 0
        %1164 = vmatprep.subr.bf16.mxu0 0
        %1165 = vmatpush1.bf16.msra.mxu0 0
        %1166 = vmatprep.subr.bf16.mxu0 0
        %1167 = vmatpush1.bf16.msra.mxu0 0
        %1168 = vmatprep.subr.bf16.mxu0 0
        %1169 = vmatpush1.bf16.msra.mxu0 0
        %1170 = vmatprep.subr.bf16.mxu0 0
        %1171 = vmatpush1.bf16.msra.mxu0 0
        %1172 = vmatprep.subr.bf16.mxu0 0
        %1173 = vmatpush1.bf16.msra.mxu0 0
        %1174 = vmatprep.subr.bf16.mxu0 0
        %1175 = vmatpush1.bf16.msra.mxu0 0
        %1176 = vmatprep.subr.bf16.mxu0 0
        %1177 = vmatpush1.bf16.msra.mxu0 0
        %1178 = vmatprep.subr.bf16.mxu0 0
        %1179 = vmatpush1.bf16.msra.mxu0 0
        %1180 = vmatprep.mubr.bf16.mxu0 0
        %1181 = vmatmul.mubr.bf16.gmra.mrb[0].mxu0 %v1045
        %v1182 = vpop.f32.mrb[0].mxu0
        %v1183 = vadd.f32 0.0, %v1182
        %v1184 = vpop.f32.mrb[0].mxu0
        %v1185 = vpop.f32.mrb[0].mxu0
        %v1186 = vadd.f32 0.0, %v1185
        %v1187 = vpop.f32.mrb[0].mxu0
        %1188 = vmatprep.mubr.bf16.mxu0 0
        %1189 = vmatmul.mubr.bf16.gmra.mrb[0].mxu0 %v1048
        %v1190 = vpop.f32.mrb[0].mxu0
        %v1191 = vadd.f32 0.0, %v1190
        %v1192 = vpop.f32.mrb[0].mxu0
        %v1193 = vpop.f32.mrb[0].mxu0
        %v1194 = vadd.f32 0.0, %v1193
        %v1195 = vpop.f32.mrb[0].mxu0
        %1196 = vdwg.mxu0
        %1197 = vmatprep.subr.bf16.mxu0 0
        %1198 = vmatpush1.bf16.msra.mxu0 %v1025
        %1199 = vmatprep.subr.bf16.mxu0 0
        %1200 = vmatpush1.bf16.msra.mxu0 0
        %1201 = vmatprep.subr.bf16.mxu0 0
        %1202 = vmatpush1.bf16.msra.mxu0 0
        %1203 = vmatprep.subr.bf16.mxu0 0
        %1204 = vmatpush1.bf16.msra.mxu0 0
        %1205 = vmatprep.subr.bf16.mxu0 0
        %1206 = vmatpush1.bf16.msra.mxu0 0
        %1207 = vmatprep.subr.bf16.mxu0 0
        %1208 = vmatpush1.bf16.msra.mxu0 0
        %1209 = vmatprep.subr.bf16.mxu0 0
        %1210 = vmatpush1.bf16.msra.mxu0 0
        %1211 = vmatprep.subr.bf16.mxu0 0
        %1212 = vmatpush1.bf16.msra.mxu0 0
        %1213 = vmatprep.subr.bf16.mxu0 0
        %1214 = vmatpush1.bf16.msra.mxu0 0
        %1215 = vmatprep.subr.bf16.mxu0 0
        %1216 = vmatpush1.bf16.msra.mxu0 0
        %1217 = vmatprep.subr.bf16.mxu0 0
        %1218 = vmatpush1.bf16.msra.mxu0 0
        %1219 = vmatprep.subr.bf16.mxu0 0
        %1220 = vmatpush1.bf16.msra.mxu0 0
        %1221 = vmatprep.subr.bf16.mxu0 0
        %1222 = vmatpush1.bf16.msra.mxu0 0
        %1223 = vmatprep.subr.bf16.mxu0 0
        %1224 = vmatpush1.bf16.msra.mxu0 0
        %1225 = vmatprep.subr.bf16.mxu0 0
        %1226 = vmatpush1.bf16.msra.mxu0 0
        %1227 = vmatprep.subr.bf16.mxu0 0
        %1228 = vmatpush1.bf16.msra.mxu0 0
        %1229 = vmatprep.mubr.bf16.mxu0 0
        %1230 = vmatmul.mubr.bf16.gmra.mrb[0].mxu0 %v1045
        %v1231 = vpop.f32.mrb[0].mxu0
        %v1232 = vadd.f32 0.0, %v1231
        %v1233 = vpop.f32.mrb[0].mxu0
        %v1234 = vpop.f32.mrb[0].mxu0
        %v1235 = vadd.f32 0.0, %v1234
        %v1236 = vpop.f32.mrb[0].mxu0
        %1237 = vmatprep.mubr.bf16.mxu0 0
        %1238 = vmatmul.mubr.bf16.gmra.mrb[0].mxu0 %v1048
        %v1239 = vpop.f32.mrb[0].mxu0
        %v1240 = vadd.f32 0.0, %v1239
        %v1241 = vpop.f32.mrb[0].mxu0
        %v1242 = vpop.f32.mrb[0].mxu0
        %v1243 = vadd.f32 0.0, %v1242
        %v1244 = vpop.f32.mrb[0].mxu0
        %1245 = vdwg.mxu0
        %1246 = vmatprep.subr.bf16.mxu0 0
        %1247 = vmatpush1.bf16.msra.mxu0 %v1026
        %1248 = vmatprep.subr.bf16.mxu0 0
        %1249 = vmatpush1.bf16.msra.mxu0 0
        %1250 = vmatprep.subr.bf16.mxu0 0
        %1251 = vmatpush1.bf16.msra.mxu0 0
        %1252 = vmatprep.subr.bf16.mxu0 0
        %1253 = vmatpush1.bf16.msra.mxu0 0
        %1254 = vmatprep.subr.bf16.mxu0 0
        %1255 = vmatpush1.bf16.msra.mxu0 0
        %1256 = vmatprep.subr.bf16.mxu0 0
        %1257 = vmatpush1.bf16.msra.mxu0 0
        %1258 = vmatprep.subr.bf16.mxu0 0
        %1259 = vmatpush1.bf16.msra.mxu0 0
        %1260 = vmatprep.subr.bf16.mxu0 0
        %1261 = vmatpush1.bf16.msra.mxu0 0
        %1262 = vmatprep.subr.bf16.mxu0 0
        %1263 = vmatpush1.bf16.msra.mxu0 0
        %1264 = vmatprep.subr.bf16.mxu0 0
        %1265 = vmatpush1.bf16.msra.mxu0 0
        %1266 = vmatprep.subr.bf16.mxu0 0
        %1267 = vmatpush1.bf16.msra.mxu0 0
        %1268 = vmatprep.subr.bf16.mxu0 0
        %1269 = vmatpush1.bf16.msra.mxu0 0
        %1270 = vmatprep.subr.bf16.mxu0 0
        %1271 = vmatpush1.bf16.msra.mxu0 0
        %1272 = vmatprep.subr.bf16.mxu0 0
        %1273 = vmatpush1.bf16.msra.mxu0 0
        %1274 = vmatprep.subr.bf16.mxu0 0
        %1275 = vmatpush1.bf16.msra.mxu0 0
        %1276 = vmatprep.subr.bf16.mxu0 0
        %1277 = vmatpush1.bf16.msra.mxu0 0
        %1278 = vmatprep.mubr.bf16.mxu0 0
        %1279 = vmatmul.mubr.bf16.gmra.mrb[0].mxu0 %v1045
        %v1280 = vpop.f32.mrb[0].mxu0
        %v1281 = vadd.f32 0.0, %v1280
        %v1282 = vpop.f32.mrb[0].mxu0
        %v1283 = vpop.f32.mrb[0].mxu0
        %v1284 = vadd.f32 0.0, %v1283
        %v1285 = vpop.f32.mrb[0].mxu0
        %1286 = vmatprep.mubr.bf16.mxu0 0
        %1287 = vmatmul.mubr.bf16.gmra.mrb[0].mxu0 %v1048
        %v1288 = vpop.f32.mrb[0].mxu0
        %v1289 = vadd.f32 0.0, %v1288
        %v1290 = vpop.f32.mrb[0].mxu0
        %v1291 = vpop.f32.mrb[0].mxu0
        %v1292 = vadd.f32 0.0, %v1291
        %v1293 = vpop.f32.mrb[0].mxu0
        %1294 = vdwg.mxu0
        %1295 = vmatprep.subr.bf16.mxu0 0
        %1296 = vmatpush1.bf16.msra.mxu0 %v1027
        %1297 = vmatprep.subr.bf16.mxu0 0
        %1298 = vmatpush1.bf16.msra.mxu0 0
        %1299 = vmatprep.subr.bf16.mxu0 0
        %1300 = vmatpush1.bf16.msra.mxu0 0
        %1301 = vmatprep.subr.bf16.mxu0 0
        %1302 = vmatpush1.bf16.msra.mxu0 0
        %1303 = vmatprep.subr.bf16.mxu0 0
        %1304 = vmatpush1.bf16.msra.mxu0 0
        %1305 = vmatprep.subr.bf16.mxu0 0
        %1306 = vmatpush1.bf16.msra.mxu0 0
        %1307 = vmatprep.subr.bf16.mxu0 0
        %1308 = vmatpush1.bf16.msra.mxu0 0
        %1309 = vmatprep.subr.bf16.mxu0 0
        %1310 = vmatpush1.bf16.msra.mxu0 0
        %1311 = vmatprep.subr.bf16.mxu0 0
        %1312 = vmatpush1.bf16.msra.mxu0 0
        %1313 = vmatprep.subr.bf16.mxu0 0
        %1314 = vmatpush1.bf16.msra.mxu0 0
        %1315 = vmatprep.subr.bf16.mxu0 0
        %1316 = vmatpush1.bf16.msra.mxu0 0
        %1317 = vmatprep.subr.bf16.mxu0 0
        %1318 = vmatpush1.bf16.msra.mxu0 0
        %1319 = vmatprep.subr.bf16.mxu0 0
        %1320 = vmatpush1.bf16.msra.mxu0 0
        %1321 = vmatprep.subr.bf16.mxu0 0
        %1322 = vmatpush1.bf16.msra.mxu0 0
        %1323 = vmatprep.subr.bf16.mxu0 0
        %1324 = vmatpush1.bf16.msra.mxu0 0
        %1325 = vmatprep.subr.bf16.mxu0 0
        %1326 = vmatpush1.bf16.msra.mxu0 0
        %1327 = vmatprep.mubr.bf16.mxu0 0
        %1328 = vmatmul.mubr.bf16.gmra.mrb[0].mxu0 %v1045
        %v1329 = vpop.f32.mrb[0].mxu0
        %v1330 = vadd.f32 0.0, %v1329
        %v1331 = vpop.f32.mrb[0].mxu0
        %v1332 = vpop.f32.mrb[0].mxu0
        %v1333 = vadd.f32 0.0, %v1332
        %v1334 = vpop.f32.mrb[0].mxu0
        %1335 = vmatprep.mubr.bf16.mxu0 0
        %1336 = vmatmul.mubr.bf16.gmra.mrb[0].mxu0 %v1048
        %v1337 = vpop.f32.mrb[0].mxu0
        %v1338 = vadd.f32 0.0, %v1337
        %v1339 = vpop.f32.mrb[0].mxu0
        %v1340 = vpop.f32.mrb[0].mxu0
        %v1341 = vadd.f32 0.0, %v1340
        %v1342 = vpop.f32.mrb[0].mxu0
        %1343 = vdwg.mxu0
        %1344 = vmatprep.subr.bf16.mxu0 0
        %1345 = vmatpush1.bf16.msra.mxu0 %v1028
        %1346 = vmatprep.subr.bf16.mxu0 0
        %1347 = vmatpush1.bf16.msra.mxu0 0
        %1348 = vmatprep.subr.bf16.mxu0 0
        %1349 = vmatpush1.bf16.msra.mxu0 0
        %1350 = vmatprep.subr.bf16.mxu0 0
        %1351 = vmatpush1.bf16.msra.mxu0 0
        %1352 = vmatprep.subr.bf16.mxu0 0
        %1353 = vmatpush1.bf16.msra.mxu0 0
        %1354 = vmatprep.subr.bf16.mxu0 0
        %1355 = vmatpush1.bf16.msra.mxu0 0
        %1356 = vmatprep.subr.bf16.mxu0 0
        %1357 = vmatpush1.bf16.msra.mxu0 0
        %1358 = vmatprep.subr.bf16.mxu0 0
        %1359 = vmatpush1.bf16.msra.mxu0 0
        %1360 = vmatprep.subr.bf16.mxu0 0
        %1361 = vmatpush1.bf16.msra.mxu0 0
        %1362 = vmatprep.subr.bf16.mxu0 0
        %1363 = vmatpush1.bf16.msra.mxu0 0
        %1364 = vmatprep.subr.bf16.mxu0 0
        %1365 = vmatpush1.bf16.msra.mxu0 0
        %1366 = vmatprep.subr.bf16.mxu0 0
        %1367 = vmatpush1.bf16.msra.mxu0 0
        %1368 = vmatprep.subr.bf16.mxu0 0
        %1369 = vmatpush1.bf16.msra.mxu0 0
        %1370 = vmatprep.subr.bf16.mxu0 0
        %1371 = vmatpush1.bf16.msra.mxu0 0
        %1372 = vmatprep.subr.bf16.mxu0 0
        %1373 = vmatpush1.bf16.msra.mxu0 0
        %1374 = vmatprep.subr.bf16.mxu0 0
        %1375 = vmatpush1.bf16.msra.mxu0 0
        %1376 = vmatprep.mubr.bf16.mxu0 0
        %1377 = vmatmul.mubr.bf16.gmra.mrb[0].mxu0 %v1045
        %v1378 = vpop.f32.mrb[0].mxu0
        %v1379 = vadd.f32 0.0, %v1378
        %v1380 = vpop.f32.mrb[0].mxu0
        %v1381 = vpop.f32.mrb[0].mxu0
        %v1382 = vadd.f32 0.0, %v1381
        %v1383 = vpop.f32.mrb[0].mxu0
        %1384 = vmatprep.mubr.bf16.mxu0 0
        %1385 = vmatmul.mubr.bf16.gmra.mrb[0].mxu0 %v1048
        %v1386 = vpop.f32.mrb[0].mxu0
        %v1387 = vadd.f32 0.0, %v1386
        %v1388 = vpop.f32.mrb[0].mxu0
        %v1389 = vpop.f32.mrb[0].mxu0
        %v1390 = vadd.f32 0.0, %v1389
        %v1391 = vpop.f32.mrb[0].mxu0
        %1392 = vdwg.mxu0
        %1393 = vmatprep.subr.bf16.mxu0 0
        %1394 = vmatpush1.bf16.msra.mxu0 %v1029
        %1395 = vmatprep.subr.bf16.mxu0 0
        %1396 = vmatpush1.bf16.msra.mxu0 0
        %1397 = vmatprep.subr.bf16.mxu0 0
        %1398 = vmatpush1.bf16.msra.mxu0 0
        %1399 = vmatprep.subr.bf16.mxu0 0
        %1400 = vmatpush1.bf16.msra.mxu0 0
        %1401 = vmatprep.subr.bf16.mxu0 0
        %1402 = vmatpush1.bf16.msra.mxu0 0
        %1403 = vmatprep.subr.bf16.mxu0 0
        %1404 = vmatpush1.bf16.msra.mxu0 0
        %1405 = vmatprep.subr.bf16.mxu0 0
        %1406 = vmatpush1.bf16.msra.mxu0 0
        %1407 = vmatprep.subr.bf16.mxu0 0
        %1408 = vmatpush1.bf16.msra.mxu0 0
        %1409 = vmatprep.subr.bf16.mxu0 0
        %1410 = vmatpush1.bf16.msra.mxu0 0
        %1411 = vmatprep.subr.bf16.mxu0 0
        %1412 = vmatpush1.bf16.msra.mxu0 0
        %1413 = vmatprep.subr.bf16.mxu0 0
        %1414 = vmatpush1.bf16.msra.mxu0 0
        %1415 = vmatprep.subr.bf16.mxu0 0
        %1416 = vmatpush1.bf16.msra.mxu0 0
        %1417 = vmatprep.subr.bf16.mxu0 0
        %1418 = vmatpush1.bf16.msra.mxu0 0
        %1419 = vmatprep.subr.bf16.mxu0 0
        %1420 = vmatpush1.bf16.msra.mxu0 0
        %1421 = vmatprep.subr.bf16.mxu0 0
        %1422 = vmatpush1.bf16.msra.mxu0 0
        %1423 = vmatprep.subr.bf16.mxu0 0
        %1424 = vmatpush1.bf16.msra.mxu0 0
        %1425 = vmatprep.mubr.bf16.mxu0 0
        %1426 = vmatmul.mubr.bf16.gmra.mrb[0].mxu0 %v1045
        %v1427 = vpop.f32.mrb[0].mxu0
        %v1428 = vadd.f32 0.0, %v1427
        %v1429 = vpop.f32.mrb[0].mxu0
        %v1430 = vpop.f32.mrb[0].mxu0
        %v1431 = vadd.f32 0.0, %v1430
        %v1432 = vpop.f32.mrb[0].mxu0
        %1433 = vmatprep.mubr.bf16.mxu0 0
        %1434 = vmatmul.mubr.bf16.gmra.mrb[0].mxu0 %v1048
        %v1435 = vpop.f32.mrb[0].mxu0
        %v1436 = vadd.f32 0.0, %v1435
        %v1437 = vpop.f32.mrb[0].mxu0
        %v1438 = vpop.f32.mrb[0].mxu0
        %v1439 = vadd.f32 0.0, %v1438
        %v1440 = vpop.f32.mrb[0].mxu0
        %1441 = vdwg.mxu0
        %v1442 = vpack.c.bf16 %v1088, %v1085
        %v1443 = vpack.c.bf16 %v1096, %v1093
        %v1444 = vpack.c.bf16 %v1137, %v1134
        %v1445 = vpack.c.bf16 %v1145, %v1142
        %v1446 = vpack.c.bf16 %v1186, %v1183
        %v1447 = vpack.c.bf16 %v1194, %v1191
        %v1448 = vpack.c.bf16 %v1235, %v1232
        %v1449 = vpack.c.bf16 %v1243, %v1240
        %v1450 = vpack.c.bf16 %v1284, %v1281
        %v1451 = vpack.c.bf16 %v1292, %v1289
        %v1452 = vpack.c.bf16 %v1333, %v1330
        %v1453 = vpack.c.bf16 %v1341, %v1338
        %v1454 = vpack.c.bf16 %v1382, %v1379
        %v1455 = vpack.c.bf16 %v1390, %v1387
        %v1456 = vpack.c.bf16 %v1431, %v1428
        %v1457 = vpack.c.bf16 %v1439, %v1436
        %v1458 = vld [vmem:[%s8] sm:$0xf]
        %v1459 = vld [vmem:[%s8 + $0x4] sm:$0xf]
        %v1462 = vunpack.c.l.b16 %v1458
        %v1463 = vunpack.c.l.b16 %v1459
        %v1464 = vpack.c.b16 %v1463, %v1462
        %v1467 = vsel %vm661, %v1442, 0
        %v1470 = vsel %vm661, %v1443, 0
        %v1473 = vsel %vm661, %v1444, 0
        %v1476 = vsel %vm661, %v1445, 0
        %v1479 = vsel %vm661, %v1446, 0
        %v1482 = vsel %vm661, %v1447, 0
        %v1485 = vsel %vm661, %v1448, 0
        %v1488 = vsel %vm661, %v1449, 0
        %v1491 = vsel %vm661, %v1450, 0
        %v1494 = vsel %vm661, %v1451, 0
        %v1497 = vsel %vm661, %v1452, 0
        %v1500 = vsel %vm661, %v1453, 0
        %v1503 = vsel %vm661, %v1454, 0
        %v1506 = vsel %vm661, %v1455, 0
        %v1509 = vsel %vm661, %v1456, 0
        %v1512 = vsel %vm661, %v1457, 0
        %1514 = vmatprep.subr.bf16.mxu0 0
        %1515 = vmatpush1.bf16.msra.mxu0 %v1464
        %1516 = vmatprep.subr.bf16.mxu0 0
        %1517 = vmatpush1.bf16.msra.mxu0 0
        %1518 = vmatprep.subr.bf16.mxu0 0
        %1519 = vmatpush1.bf16.msra.mxu0 0
        %1520 = vmatprep.subr.bf16.mxu0 0
        %1521 = vmatpush1.bf16.msra.mxu0 0
        %1522 = vmatprep.subr.bf16.mxu0 0
        %1523 = vmatpush1.bf16.msra.mxu0 0
        %1524 = vmatprep.subr.bf16.mxu0 0
        %1525 = vmatpush1.bf16.msra.mxu0 0
        %1526 = vmatprep.subr.bf16.mxu0 0
        %1527 = vmatpush1.bf16.msra.mxu0 0
        %1528 = vmatprep.subr.bf16.mxu0 0
        %1529 = vmatpush1.bf16.msra.mxu0 0
        %1530 = vmatprep.subr.bf16.mxu0 0
        %1531 = vmatpush1.bf16.msra.mxu0 0
        %1532 = vmatprep.subr.bf16.mxu0 0
        %1533 = vmatpush1.bf16.msra.mxu0 0
        %1534 = vmatprep.subr.bf16.mxu0 0
        %1535 = vmatpush1.bf16.msra.mxu0 0
        %1536 = vmatprep.subr.bf16.mxu0 0
        %1537 = vmatpush1.bf16.msra.mxu0 0
        %1538 = vmatprep.subr.bf16.mxu0 0
        %1539 = vmatpush1.bf16.msra.mxu0 0
        %1540 = vmatprep.subr.bf16.mxu0 0
        %1541 = vmatpush1.bf16.msra.mxu0 0
        %1542 = vmatprep.subr.bf16.mxu0 0
        %1543 = vmatpush1.bf16.msra.mxu0 0
        %1544 = vmatprep.subr.bf16.mxu0 0
        %1545 = vmatpush1.bf16.msra.mxu0 0
        %1546 = vmatprep.mubr.bf16.mxu0 0
        %1547 = vmatmul.mubr.bf16.gmra.mrb[0].mxu0 %v1467
        %v1548 = vpop.f32.mrb[0].mxu0
        %v1549 = vadd.f32 0.0, %v1548
        %v1550 = vpop.f32.mrb[0].mxu0
        %v1551 = vpop.f32.mrb[0].mxu0
        %v1552 = vadd.f32 0.0, %v1551
        %v1553 = vpop.f32.mrb[0].mxu0
        %1554 = vmatprep.mubr.bf16.mxu0 0
        %1555 = vmatmul.mubr.bf16.gmra.mrb[0].mxu0 %v1470
        %v1556 = vpop.f32.mrb[0].mxu0
        %v1557 = vadd.f32 0.0, %v1556
        %v1558 = vpop.f32.mrb[0].mxu0
        %v1559 = vpop.f32.mrb[0].mxu0
        %v1560 = vadd.f32 0.0, %v1559
        %v1561 = vpop.f32.mrb[0].mxu0
        %1562 = vmatprep.mubr.bf16.mxu0 0
        %1563 = vmatmul.mubr.bf16.gmra.mrb[0].mxu0 %v1473
        %v1564 = vpop.f32.mrb[0].mxu0
        %v1565 = vadd.f32 0.0, %v1564
        %v1566 = vpop.f32.mrb[0].mxu0
        %v1567 = vpop.f32.mrb[0].mxu0
        %v1568 = vadd.f32 0.0, %v1567
        %v1569 = vpop.f32.mrb[0].mxu0
        %1570 = vmatprep.mubr.bf16.mxu0 0
        %1571 = vmatmul.mubr.bf16.gmra.mrb[0].mxu0 %v1476
        %v1572 = vpop.f32.mrb[0].mxu0
        %v1573 = vadd.f32 0.0, %v1572
        %v1574 = vpop.f32.mrb[0].mxu0
        %v1575 = vpop.f32.mrb[0].mxu0
        %v1576 = vadd.f32 0.0, %v1575
        %v1577 = vpop.f32.mrb[0].mxu0
        %1578 = vmatprep.mubr.bf16.mxu0 0
        %1579 = vmatmul.mubr.bf16.gmra.mrb[0].mxu0 %v1479
        %v1580 = vpop.f32.mrb[0].mxu0
        %v1581 = vadd.f32 0.0, %v1580
        %v1582 = vpop.f32.mrb[0].mxu0
        %v1583 = vpop.f32.mrb[0].mxu0
        %v1584 = vadd.f32 0.0, %v1583
        %v1585 = vpop.f32.mrb[0].mxu0
        %1586 = vmatprep.mubr.bf16.mxu0 0
        %1587 = vmatmul.mubr.bf16.gmra.mrb[0].mxu0 %v1482
        %v1588 = vpop.f32.mrb[0].mxu0
        %v1589 = vadd.f32 0.0, %v1588
        %v1590 = vpop.f32.mrb[0].mxu0
        %v1591 = vpop.f32.mrb[0].mxu0
        %v1592 = vadd.f32 0.0, %v1591
        %v1593 = vpop.f32.mrb[0].mxu0
        %1594 = vmatprep.mubr.bf16.mxu0 0
        %1595 = vmatmul.mubr.bf16.gmra.mrb[0].mxu0 %v1485
        %v1596 = vpop.f32.mrb[0].mxu0
        %v1597 = vadd.f32 0.0, %v1596
        %v1598 = vpop.f32.mrb[0].mxu0
        %v1599 = vpop.f32.mrb[0].mxu0
        %v1600 = vadd.f32 0.0, %v1599
        %v1601 = vpop.f32.mrb[0].mxu0
        %1602 = vmatprep.mubr.bf16.mxu0 0
        %1603 = vmatmul.mubr.bf16.gmra.mrb[0].mxu0 %v1488
        %v1604 = vpop.f32.mrb[0].mxu0
        %v1605 = vadd.f32 0.0, %v1604
        %v1606 = vpop.f32.mrb[0].mxu0
        %v1607 = vpop.f32.mrb[0].mxu0
        %v1608 = vadd.f32 0.0, %v1607
        %v1609 = vpop.f32.mrb[0].mxu0
        %1610 = vmatprep.mubr.bf16.mxu0 0
        %1611 = vmatmul.mubr.bf16.gmra.mrb[0].mxu0 %v1491
        %v1612 = vpop.f32.mrb[0].mxu0
        %v1613 = vadd.f32 0.0, %v1612
        %v1614 = vpop.f32.mrb[0].mxu0
        %v1615 = vpop.f32.mrb[0].mxu0
        %v1616 = vadd.f32 0.0, %v1615
        %v1617 = vpop.f32.mrb[0].mxu0
        %1618 = vmatprep.mubr.bf16.mxu0 0
        %1619 = vmatmul.mubr.bf16.gmra.mrb[0].mxu0 %v1494
        %v1620 = vpop.f32.mrb[0].mxu0
        %v1621 = vadd.f32 0.0, %v1620
        %v1622 = vpop.f32.mrb[0].mxu0
        %v1623 = vpop.f32.mrb[0].mxu0
        %v1624 = vadd.f32 0.0, %v1623
        %v1625 = vpop.f32.mrb[0].mxu0
        %1626 = vmatprep.mubr.bf16.mxu0 0
        %1627 = vmatmul.mubr.bf16.gmra.mrb[0].mxu0 %v1497
        %v1628 = vpop.f32.mrb[0].mxu0
        %v1629 = vadd.f32 0.0, %v1628
        %v1630 = vpop.f32.mrb[0].mxu0
        %v1631 = vpop.f32.mrb[0].mxu0
        %v1632 = vadd.f32 0.0, %v1631
        %v1633 = vpop.f32.mrb[0].mxu0
        %1634 = vmatprep.mubr.bf16.mxu0 0
        %1635 = vmatmul.mubr.bf16.gmra.mrb[0].mxu0 %v1500
        %v1636 = vpop.f32.mrb[0].mxu0
        %v1637 = vadd.f32 0.0, %v1636
        %v1638 = vpop.f32.mrb[0].mxu0
        %v1639 = vpop.f32.mrb[0].mxu0
        %v1640 = vadd.f32 0.0, %v1639
        %v1641 = vpop.f32.mrb[0].mxu0
        %1642 = vmatprep.mubr.bf16.mxu0 0
        %1643 = vmatmul.mubr.bf16.gmra.mrb[0].mxu0 %v1503
        %v1644 = vpop.f32.mrb[0].mxu0
        %v1645 = vadd.f32 0.0, %v1644
        %v1646 = vpop.f32.mrb[0].mxu0
        %v1647 = vpop.f32.mrb[0].mxu0
        %v1648 = vadd.f32 0.0, %v1647
        %v1649 = vpop.f32.mrb[0].mxu0
        %1650 = vmatprep.mubr.bf16.mxu0 0
        %1651 = vmatmul.mubr.bf16.gmra.mrb[0].mxu0 %v1506
        %v1652 = vpop.f32.mrb[0].mxu0
        %v1653 = vadd.f32 0.0, %v1652
        %v1654 = vpop.f32.mrb[0].mxu0
        %v1655 = vpop.f32.mrb[0].mxu0
        %v1656 = vadd.f32 0.0, %v1655
        %v1657 = vpop.f32.mrb[0].mxu0
        %1658 = vmatprep.mubr.bf16.mxu0 0
        %1659 = vmatmul.mubr.bf16.gmra.mrb[0].mxu0 %v1509
        %v1660 = vpop.f32.mrb[0].mxu0
        %v1661 = vadd.f32 0.0, %v1660
        %v1662 = vpop.f32.mrb[0].mxu0
        %v1663 = vpop.f32.mrb[0].mxu0
        %v1664 = vadd.f32 0.0, %v1663
        %v1665 = vpop.f32.mrb[0].mxu0
        %1666 = vmatprep.mubr.bf16.mxu0 0
        %1667 = vmatmul.mubr.bf16.gmra.mrb[0].mxu0 %v1512
        %v1668 = vpop.f32.mrb[0].mxu0
        %v1669 = vadd.f32 0.0, %v1668
        %v1670 = vpop.f32.mrb[0].mxu0
        %v1671 = vpop.f32.mrb[0].mxu0
        %v1672 = vadd.f32 0.0, %v1671
        %v1673 = vpop.f32.mrb[0].mxu0
        %1674 = vdwg.mxu0
        %vm1675 = vcmask 261120
        %1676 = vst.msk [vmem:[%s365] sm:$0xff] %vm1675, %v1549
        %1677 = vst.msk [vmem:[%s365 + $0x8] sm:$0xff] %vm1675, %v1552
        %1678 = vst.msk [vmem:[%s365 + $0x10] sm:$0xff] %vm1675, %v1557
        %1679 = vst.msk [vmem:[%s365 + $0x18] sm:$0xff] %vm1675, %v1560
        %1680 = vst.msk [vmem:[%s365 + $0x20] sm:$0xff] %vm1675, %v1565
        %1681 = vst.msk [vmem:[%s365 + $0x28] sm:$0xff] %vm1675, %v1568
        %1682 = vst.msk [vmem:[%s365 + $0x30] sm:$0xff] %vm1675, %v1573
        %1683 = vst.msk [vmem:[%s365 + $0x38] sm:$0xff] %vm1675, %v1576
        %1684 = vst.msk [vmem:[%s365 + $0x40] sm:$0xff] %vm1675, %v1581
        %1685 = vst.msk [vmem:[%s365 + $0x48] sm:$0xff] %vm1675, %v1584
        %1686 = vst.msk [vmem:[%s365 + $0x50] sm:$0xff] %vm1675, %v1589
        %1687 = vst.msk [vmem:[%s365 + $0x58] sm:$0xff] %vm1675, %v1592
        %1688 = vst.msk [vmem:[%s365 + $0x60] sm:$0xff] %vm1675, %v1597
        %1689 = vst.msk [vmem:[%s365 + $0x68] sm:$0xff] %vm1675, %v1600
        %1690 = vst.msk [vmem:[%s365 + $0x70] sm:$0xff] %vm1675, %v1605
        %1691 = vst.msk [vmem:[%s365 + $0x78] sm:$0xff] %vm1675, %v1608
        %1692 = vst.msk [vmem:[%s365 + $0x80] sm:$0xff] %vm1675, %v1613
        %1693 = vst.msk [vmem:[%s365 + $0x88] sm:$0xff] %vm1675, %v1616
        %1694 = vst.msk [vmem:[%s365 + $0x90] sm:$0xff] %vm1675, %v1621
        %1695 = vst.msk [vmem:[%s365 + $0x98] sm:$0xff] %vm1675, %v1624
        %1696 = vst.msk [vmem:[%s365 + $0xa0] sm:$0xff] %vm1675, %v1629
        %1697 = vst.msk [vmem:[%s365 + $0xa8] sm:$0xff] %vm1675, %v1632
        %1698 = vst.msk [vmem:[%s365 + $0xb0] sm:$0xff] %vm1675, %v1637
        %1699 = vst.msk [vmem:[%s365 + $0xb8] sm:$0xff] %vm1675, %v1640
        %1700 = vst.msk [vmem:[%s365 + $0xc0] sm:$0xff] %vm1675, %v1645
        %1701 = vst.msk [vmem:[%s365 + $0xc8] sm:$0xff] %vm1675, %v1648
        %1702 = vst.msk [vmem:[%s365 + $0xd0] sm:$0xff] %vm1675, %v1653
        %1703 = vst.msk [vmem:[%s365 + $0xd8] sm:$0xff] %vm1675, %v1656
        %1704 = vst.msk [vmem:[%s365 + $0xe0] sm:$0xff] %vm1675, %v1661
        %1705 = vst.msk [vmem:[%s365 + $0xe8] sm:$0xff] %vm1675, %v1664
        %1706 = vst.msk [vmem:[%s365 + $0xf0] sm:$0xff] %vm1675, %v1669
        %1707 = vst.msk [vmem:[%s365 + $0xf8] sm:$0xff] %vm1675, %v1672
        %s1708 = sand.u32 %s249, 1
        %s1709 = scalar_lea.sflag [#allocation4], %s1708
        %s1710 = sand.u32 %s249, 1
        %s1711 = smul.addr %s1710, 256
        %s1712 = scalar_lea.vmem [#allocation3], %s1711
        // Predicated region
        $region61: #{tpu_custom_call.1} parent=55 // pred_check
          %p1713 = pneg %p259
        $region62: #{tpu_custom_call.1} parent=55 // pred_check_branch
          %1715 = sbr.rel (%p1713) target = $region64
        $region63: #{tpu_custom_call.1} parent=55 // pred_region
          %s1716 = smul.u32 8, %s28
          %s1718 = ssub.s32 4096, 4096
          %1719 = vsyncadd %s1709, %s1718
          %s1720 = smul.addr %s1716, 4
          %s1721 = smul.addr %s27, 32
          %s1722 = sadd.s32 %s1720, %s1721
          %s1723 = smul.addr %s1722, 128
          %s1724 = scalar_lea.hbm %s9, %s1723
          %s1725 = sshll.u32 %s1712, 4
          %s1726 = int_to_ptr.vmem [resolvable:$true] %s1725
          %1731 = dma.vmem_to_hbm [thread:$0]  %s1726, 4096, %s1724, %s1709, 128, 128, 8
        $region64: #{tpu_custom_call.1} parent=55 // pred_fallthru
          _
      $region56: #{tpu_custom_call.1} parent=5 // pred_fallthru
        _
      %p1732 = scmp.le.s32.totalorder 2, %s18
      // Predicated region
      $region65: #{tpu_custom_call.1} parent=5 // pred_check
        %p1733 = pneg %p1732
      $region66: #{tpu_custom_call.1} parent=5 // pred_check_branch
        %1735 = sbr.rel (%p1733) target = $region68
      $region67: #{tpu_custom_call.1} parent=5 // pred_region
        %s1736 = ssub.s32 %s18, 2
        // Predicated region
        $region69: #{tpu_custom_call.1} parent=67 // pred_check
          %p1737 = pneg %p265
        $region70: #{tpu_custom_call.1} parent=67 // pred_check_branch
          %1739 = sbr.rel (%p1737) target = $region72
        $region71: #{tpu_custom_call.1} parent=67 // pred_region
          %s1740 = sand.u32 %s250, 1
          %s1741 = scalar_lea.sflag [#allocation4], %s1740
          %s1742 = sand.u32 %s250, 1
          %s1743 = smul.addr %s1742, 256
          %s1744 = scalar_lea.vmem [#allocation3], %s1743
          %1745 = dma.done %s1741, 4096
        $region72: #{tpu_custom_call.1} parent=67 // pred_fallthru
          _
      $region68: #{tpu_custom_call.1} parent=5 // pred_fallthru
        _
    $region6: #{tpu_custom_call.1} parent=1 // loop_footer
      %s22 = sadd.s32 1, %s18
    $region7: #{tpu_custom_call.1} parent=1 // loop_footer_branch
      %17 = sbr.rel target = $region3
    $region8: #{tpu_custom_call.1} parent=1 // loop_exit
      _
    %1746 = vsyncpa [#allocation4], 1
    %s1747 = scalar_lea.sflag [#allocation4], 1
    %1748 = vsyncpa %s1747, 1

</llo_original>
